<compile_context>
chip_gen: v7x
topology: tpu7x:2x2x1
jax: 0.10.0
libtpu: 0.0.40
codegen_flags: <defaults>
</compile_context>

<pallas_src>
import functools

import jax
import jax.numpy as jnp
import numpy as np
from jax.experimental import pallas as pl
from jax.experimental.pallas import tpu as pltpu

EPS = 1e-5                      # nn.BatchNorm2d default eps
MXU_DTYPE = jnp.bfloat16        # MXU operand dtype (accumulation stays f32)


# --------------------------------------------------------------------------- #
# Wrapper-side weight packing: fold KW taps + W-direction 'same' padding into a
# banded block matrix so each conv becomes KH deep matmuls.
# --------------------------------------------------------------------------- #
def _pack_conv_weight(w_hwio, width):
    """(KH, KW, Cin, Cout) -> (KH, width*Cin, width*Cout) with
    big[kh][(win, ci), (wout, co)] = w[kh, win - wout + KW//2, ci, co]
    (zero outside the band, which realizes the W-direction zero padding)."""
    KH, KW, Cin, Cout = w_hwio.shape
    pw = KW // 2
    wout = jnp.arange(width)[:, None]                      # (W, 1)
    kw = jnp.arange(KW)[None, :]                           # (1, KW)
    win = wout + kw - pw                                   # (W, KW)
    valid = (win >= 0) & (win < width)
    win_c = jnp.clip(win, 0, width - 1)
    val = jnp.broadcast_to(w_hwio[:, None], (KH, width, KW, Cin, Cout))
    val = jnp.where(valid[None, :, :, None, None], val, 0.0)
    scat = jnp.zeros((KH, width, width, Cin, Cout), w_hwio.dtype)
    scat = scat.at[:, win_c, wout].add(val)                # [kh, win, wout, ci, co]
    return scat.transpose(0, 1, 3, 2, 4).reshape(KH, width * Cin, width * Cout)


# --------------------------------------------------------------------------- #
# In-kernel helpers
# --------------------------------------------------------------------------- #
def _bn_train(y, gamma, beta, C, Wd, count):
    """Train-mode BatchNorm over a (rows, Wd*C) activation whose lane axis
    interleaves (w, c).  Single pass (sum / sum-of-squares), per-channel
    scale/shift folded into one FMA.  gamma/beta: (C, 1) f32."""
    WC = Wd * C
    lane_ch = jax.lax.broadcasted_iota(jnp.int32, (C, WC), 1) % C
    chan = jax.lax.broadcasted_iota(jnp.int32, (C, WC), 0)
    sel = (lane_ch == chan).astype(jnp.float32)            # (C, WC)

    col_s = jnp.sum(y, axis=0, keepdims=True)              # (1, WC)
    col_ss = jnp.sum(y * y, axis=0, keepdims=True)         # (1, WC)
    s = jnp.sum(sel * col_s, axis=1, keepdims=True)        # (C, 1)
    ss = jnp.sum(sel * col_ss, axis=1, keepdims=True)      # (C, 1)

    mean = s / count
    var = jnp.maximum(ss / count - mean * mean, 0.0)
    scale = gamma * jax.lax.rsqrt(var + EPS)               # (C, 1)
    shift = beta - mean * scale                            # (C, 1)

    scale_l = jnp.sum(sel * scale, axis=0, keepdims=True)  # (1, WC)
    shift_l = jnp.sum(sel * shift, axis=0, keepdims=True)  # (1, WC)
    return y * scale_l + shift_l


def bottleneck_kernel(*refs, identity_residual, N, H, W, KH, Ci, Ch, Co):
    if identity_residual:
        (x_ref, w1_ref, g1_ref, be1_ref,
         w2_ref, g2_ref, be2_ref, out_ref, ypad_scr) = refs
        wr_ref = None
    else:
        (x_ref, w1_ref, g1_ref, be1_ref,
         w2_ref, g2_ref, be2_ref, wr_ref, out_ref, ypad_scr) = refs

    ph = (KH - 1) // 2
    count = float(N * H * W)

    def conv_rows(src_ref, wbig_ref, out_lanes):
        # KH accumulating matmuls, each contracting over the full W*Cin lanes.
        acc = jnp.zeros((N * H, out_lanes), jnp.float32)
        for kh in range(KH):
            lhs = src_ref[:, kh:kh + H, :].reshape(N * H, -1)
            acc = acc + jnp.dot(lhs.astype(MXU_DTYPE), wbig_ref[kh],
                                preferred_element_type=jnp.float32)
        return acc

    # ---- conv1 -> BN1 -> ReLU (conv bias omitted: cancelled by BN mean) -----
    y = conv_rows(x_ref, w1_ref, W * Ch)
    y = _bn_train(y, g1_ref[...], be1_ref[...], Ch, W, count)
    y = jnp.maximum(y, 0.0)

    # ---- stage intermediate: zero only the H-halo rows, write interior once -
    if ph > 0:
        halo = jnp.zeros((N, ph, W * Ch), MXU_DTYPE)
        ypad_scr[:, :ph, :] = halo
        ypad_scr[:, ph + H:, :] = halo
    ypad_scr[:, ph:ph + H, :] = y.astype(MXU_DTYPE).reshape(N, H, W * Ch)

    # ---- conv2 -> BN2 -------------------------------------------------------
    z = conv_rows(ypad_scr, w2_ref, W * Co)
    z = _bn_train(z, g2_ref[...], be2_ref[...], Co, W, count)

    # ---- residual: identity add, or 1x1 conv as one block-diagonal matmul ---
    x_in = x_ref[:, ph:ph + H, :].reshape(N * H, W * Ci)
    if identity_residual:
        r = x_in.astype(jnp.float32)
    else:
        r = jnp.dot(x_in.astype(MXU_DTYPE), wr_ref[...],
                    preferred_element_type=jnp.float32)

    out_ref[...] = jnp.maximum(z + r, 0.0)


# --------------------------------------------------------------------------- #
# Wrapper
# --------------------------------------------------------------------------- #
def bottleneck_residual_conv2d(x_nchw, params):
    """params = (w1, b1, g1, be1, w2, b2, g2, be2, wr); conv weights in HWIO,
    wr is (Cin, Cout) or None for the identity residual."""
    w1, b1, g1, be1, w2, b2, g2, be2, wr = params
    N, Ci, H, W = x_nchw.shape
    KH, KW, _, Ch = w1.shape
    Co = w2.shape[-1]
    assert KH % 2 == 1 and KW % 2 == 1, "module asserts odd kernel sizes"
    ph = KH // 2
    identity = wr is None
    if identity:
        assert Ci == Co

    # NCHW -> (N, H, W*Ci): (w, c) packed on the lane axis; pad H only (the
    # W-direction 'same' padding is folded into the packed weights).
    x = jnp.transpose(x_nchw, (0, 2, 3, 1)).reshape(N, H, W * Ci)
    xh = jnp.pad(x, ((0, 0), (ph, ph), (0, 0)))
    xh = xh.astype(jnp.float32 if identity else MXU_DTYPE)

    w1p = _pack_conv_weight(w1, W).astype(MXU_DTYPE)         # (KH, W*Ci, W*Ch)
    w2p = _pack_conv_weight(w2, W).astype(MXU_DTYPE)         # (KH, W*Ch, W*Co)
    # b1/b2 intentionally dropped: bias before train-mode BN is cancelled.
    del b1, b2

    args = [xh, w1p,
            g1.reshape(Ch, 1).astype(jnp.float32),
            be1.reshape(Ch, 1).astype(jnp.float32),
            w2p,
            g2.reshape(Co, 1).astype(jnp.float32),
            be2.reshape(Co, 1).astype(jnp.float32)]
    if not identity:
        wrp = _pack_conv_weight(wr[None, None], W).astype(MXU_DTYPE)[0]
        args.append(wrp)                                     # (W*Ci, W*Co)

    kern = functools.partial(bottleneck_kernel, identity_residual=identity,
                             N=N, H=H, W=W, KH=KH, Ci=Ci, Ch=Ch, Co=Co)

    flops = (2 * N * H * KH * (W * Ci) * (W * Ch)
             + 2 * N * H * KH * (W * Ch) * (W * Co)
             + (0 if identity else 2 * N * H * (W * Ci) * (W * Co)))
    bytes_accessed = sum(int(a.size) * a.dtype.itemsize for a in args) \
        + N * H * W * Co * 4

    vmem = pl.BlockSpec(memory_space=pltpu.MemorySpace.VMEM)
    out = pl.pallas_call(
        kern,
        out_shape=jax.ShapeDtypeStruct((N * H, W * Co), jnp.float32),
        in_specs=[vmem] * len(args),
        out_specs=vmem,
        scratch_shapes=[pltpu.VMEM((N, H + KH - 1, W * Ch), MXU_DTYPE)],
        compiler_params=pltpu.CompilerParams(
            vmem_limit_bytes=32 * 1024 * 1024),
        cost_estimate=pl.CostEstimate(flops=flops,
                                      transcendentals=2 * (Ch + Co),
                                      bytes_accessed=bytes_accessed),
    )(*args)

    # lane-dense (N*H, W*Co) -> NCHW
    return jnp.transpose(out.reshape(N, H, W, Co), (0, 3, 1, 2))


# --------------------------------------------------------------------------- #
# Pure-JAX reference mirroring the PyTorch forward (training-mode BN)
# --------------------------------------------------------------------------- #
def reference(x_nchw, params):
    w1, b1, g1, be1, w2, b2, g2, be2, wr = params

    def conv(x, w, b):
        y = jax.lax.conv_general_dilated(
            x, jnp.transpose(w, (3, 2, 0, 1)), (1, 1), 'SAME',
            dimension_numbers=('NCHW', 'OIHW', 'NCHW'))
        return y + b[None, :, None, None]

    def bn(y, g, be):
        m = jnp.mean(y, axis=(0, 2, 3), keepdims=True)
        v = jnp.mean((y - m) ** 2, axis=(0, 2, 3), keepdims=True)
        return (y - m) / jnp.sqrt(v + EPS) * g[None, :, None, None] \
            + be[None, :, None, None]

    y = jnp.maximum(bn(conv(x_nchw, w1, b1), g1, be1), 0.0)
    z = bn(conv(y, w2, b2), g2, be2)
    r = x_nchw if wr is None else jnp.einsum('nchw,co->nohw', x_nchw, wr)
    return jnp.maximum(z + r, 0.0)


def make_params(key, in_ch, out_ch, kernel_size):
    hid = min(in_ch, out_ch)
    KH, KW = kernel_size
    k1, k2, k3, k4, k5 = jax.random.split(key, 5)
    s1 = 1.0 / np.sqrt(in_ch * KH * KW)
    s2 = 1.0 / np.sqrt(hid * KH * KW)
    w1 = jax.random.uniform(k1, (KH, KW, in_ch, hid), jnp.float32, -s1, s1)
    b1 = jax.random.uniform(k2, (hid,), jnp.float32, -s1, s1)
    w2 = jax.random.uniform(k3, (KH, KW, hid, out_ch), jnp.float32, -s2, s2)
    b2 = jax.random.uniform(k4, (out_ch,), jnp.float32, -s2, s2)
    g1, be1 = jnp.ones((hid,), jnp.float32), jnp.zeros((hid,), jnp.float32)
    g2, be2 = jnp.ones((out_ch,), jnp.float32), jnp.zeros((out_ch,), jnp.float32)
    if in_ch == out_ch:
        wr = None                                  # nn.Sequential() identity
    else:
        sr = 1.0 / np.sqrt(in_ch)
        wr = jax.random.uniform(k5, (in_ch, out_ch), jnp.float32, -sr, sr)
    return (w1, b1, g1, be1, w2, b2, g2, be2, wr)


if __name__ == "__main__":
    key = jax.random.PRNGKey(0)
    # (Cin, Cout): projection residual and identity residual variants.
    for cin, cout in [(4, 8), (4, 4)]:
        key, kx, kp = jax.random.split(key, 3)
        x = jax.random.normal(kx, (2, cin, 16, 16), jnp.float32)
        params = make_params(kp, cin, cout, (3, 3))

        out = jax.block_until_ready(bottleneck_residual_conv2d(x, params))
        ref = jax.block_until_ready(reference(x, params))
        # bf16 MXU operands (f32 accumulation) -> compare with a loose tolerance.
        np.testing.assert_allclose(np.asarray(out), np.asarray(ref),
                                   rtol=5e-2, atol=5e-2)
    print("KERNEL_OK")
</pallas_src>

<mosaic_0001>
module attributes {stable_mosaic.version = 11 : i64} {
  func.func @bottleneck_kernel(%arg0: memref<2x18x64xbf16, #tpu.memory_space<vmem>>, %arg1: memref<3x64x64xbf16, #tpu.memory_space<vmem>>, %arg2: memref<4x1xf32, #tpu.memory_space<vmem>>, %arg3: memref<4x1xf32, #tpu.memory_space<vmem>>, %arg4: memref<3x64x128xbf16, #tpu.memory_space<vmem>>, %arg5: memref<8x1xf32, #tpu.memory_space<vmem>>, %arg6: memref<8x1xf32, #tpu.memory_space<vmem>>, %arg7: memref<64x128xbf16, #tpu.memory_space<vmem>>, %arg8: memref<32x128xf32, #tpu.memory_space<vmem>>, %arg9: memref<2x18x64xbf16, #tpu.memory_space<vmem>>) attributes {dimension_semantics = [], scalar_prefetch = 0 : i64, scratch_operands = 1 : i64, tpu.core_type = #tpu.core_type<tc>} {
    %cst = arith.constant 0.000000e+00 : f32
    %0 = vector.broadcast %cst : f32 to vector<32x64xf32>
    %c0 = arith.constant 0 : index
    %c0_0 = arith.constant 0 : index
    %c0_1 = arith.constant 0 : index
    %1 = vector.load %arg0[%c0, %c0_0, %c0_1] : memref<2x18x64xbf16, #tpu.memory_space<vmem>>, vector<2x16x64xbf16>
    %2 = vector.shape_cast %1 : vector<2x16x64xbf16> to vector<32x64xbf16>
    %c0_2 = arith.constant 0 : index
    %c0_3 = arith.constant 0 : index
    %c0_4 = arith.constant 0 : index
    %3 = vector.load %arg1[%c0_2, %c0_3, %c0_4] : memref<3x64x64xbf16, #tpu.memory_space<vmem>>, vector<1x64x64xbf16>
    %4 = vector.shape_cast %3 : vector<1x64x64xbf16> to vector<64x64xbf16>
    %cst_5 = arith.constant dense<0.000000e+00> : vector<32x64xf32>
    %5 = tpu.matmul %2, %4, %cst_5 {dimension_numbers = #tpu.dot_dimension_numbers<[1], [0], [0], [1], [0, 0, 1, 1], [], []>} : vector<32x64xbf16>, vector<64x64xbf16>, vector<32x64xf32> -> vector<32x64xf32>
    %6 = arith.addf %0, %5 : vector<32x64xf32>
    %c0_6 = arith.constant 0 : index
    %c1 = arith.constant 1 : index
    %c0_7 = arith.constant 0 : index
    %7 = vector.load %arg0[%c0_6, %c1, %c0_7] : memref<2x18x64xbf16, #tpu.memory_space<vmem>>, vector<2x16x64xbf16>
    %8 = vector.shape_cast %7 : vector<2x16x64xbf16> to vector<32x64xbf16>
    %c1_8 = arith.constant 1 : index
    %c0_9 = arith.constant 0 : index
    %c0_10 = arith.constant 0 : index
    %9 = vector.load %arg1[%c1_8, %c0_9, %c0_10] : memref<3x64x64xbf16, #tpu.memory_space<vmem>>, vector<1x64x64xbf16>
    %10 = vector.shape_cast %9 : vector<1x64x64xbf16> to vector<64x64xbf16>
    %cst_11 = arith.constant dense<0.000000e+00> : vector<32x64xf32>
    %11 = tpu.matmul %8, %10, %cst_11 {dimension_numbers = #tpu.dot_dimension_numbers<[1], [0], [0], [1], [0, 0, 1, 1], [], []>} : vector<32x64xbf16>, vector<64x64xbf16>, vector<32x64xf32> -> vector<32x64xf32>
    %12 = arith.addf %6, %11 : vector<32x64xf32>
    %c0_12 = arith.constant 0 : index
    %c2 = arith.constant 2 : index
    %c0_13 = arith.constant 0 : index
    %13 = vector.load %arg0[%c0_12, %c2, %c0_13] : memref<2x18x64xbf16, #tpu.memory_space<vmem>>, vector<2x16x64xbf16>
    %14 = vector.shape_cast %13 : vector<2x16x64xbf16> to vector<32x64xbf16>
    %c2_14 = arith.constant 2 : index
    %c0_15 = arith.constant 0 : index
    %c0_16 = arith.constant 0 : index
    %15 = vector.load %arg1[%c2_14, %c0_15, %c0_16] : memref<3x64x64xbf16, #tpu.memory_space<vmem>>, vector<1x64x64xbf16>
    %16 = vector.shape_cast %15 : vector<1x64x64xbf16> to vector<64x64xbf16>
    %cst_17 = arith.constant dense<0.000000e+00> : vector<32x64xf32>
    %17 = tpu.matmul %14, %16, %cst_17 {dimension_numbers = #tpu.dot_dimension_numbers<[1], [0], [0], [1], [0, 0, 1, 1], [], []>} : vector<32x64xbf16>, vector<64x64xbf16>, vector<32x64xf32> -> vector<32x64xf32>
    %18 = arith.addf %12, %17 : vector<32x64xf32>
    %c0_18 = arith.constant 0 : index
    %c0_19 = arith.constant 0 : index
    %19 = vector.load %arg2[%c0_18, %c0_19] : memref<4x1xf32, #tpu.memory_space<vmem>>, vector<4x1xf32>
    %c0_20 = arith.constant 0 : index
    %c0_21 = arith.constant 0 : index
    %20 = vector.load %arg3[%c0_20, %c0_21] : memref<4x1xf32, #tpu.memory_space<vmem>>, vector<4x1xf32>
    %21 = tpu.iota {dimensions = array<i32: 1>} : vector<4x64xi32>
    %c4_i32 = arith.constant 4 : i32
    %c0_i32 = arith.constant 0 : i32
    %22 = arith.cmpi eq, %c4_i32, %c0_i32 : i32
    %c1_i32 = arith.constant 1 : i32
    %23 = arith.select %22, %c1_i32, %c4_i32 : i32
    %24 = vector.broadcast %23 : i32 to vector<4x64xi32>
    %25 = arith.remsi %21, %24 : vector<4x64xi32>
    %c0_i32_22 = arith.constant 0 : i32
    %26 = vector.broadcast %c0_i32_22 : i32 to vector<4x64xi32>
    %27 = arith.cmpi ne, %25, %26 : vector<4x64xi32>
    %c0_i32_23 = arith.constant 0 : i32
    %28 = vector.broadcast %c0_i32_23 : i32 to vector<4x64xi32>
    %29 = arith.cmpi slt, %25, %28 : vector<4x64xi32>
    %c0_i32_24 = arith.constant 0 : i32
    %30 = arith.cmpi slt, %23, %c0_i32_24 : i32
    %31 = vector.broadcast %30 : i1 to vector<4x64xi1>
    %32 = vector.broadcast %31 : vector<4x64xi1> to vector<4x64xi1>
    %33 = arith.xori %29, %32 : vector<4x64xi1>
    %34 = arith.andi %33, %27 : vector<4x64xi1>
    %35 = vector.broadcast %23 : i32 to vector<4x64xi32>
    %36 = arith.addi %25, %35 : vector<4x64xi32>
    %37 = arith.select %34, %36, %25 : vector<4x64xi1>, vector<4x64xi32>
    %38 = tpu.iota {dimensions = array<i32: 0>} : vector<4x64xi32>
    %39 = arith.cmpi eq, %37, %38 : vector<4x64xi32>
    %40 = arith.extui %39 : vector<4x64xi1> to vector<4x64xi32>
    %41 = arith.sitofp %40 : vector<4x64xi32> to vector<4x64xf32>
    %cst_25 = arith.constant dense<0.000000e+00> : vector<64xf32>
    %42 = vector.multi_reduction <add>, %18, %cst_25 [0] : vector<32x64xf32> to vector<64xf32>
    %43 = vector.shape_cast %42 : vector<64xf32> to vector<1x64xf32>
    %44 = arith.mulf %18, %18 : vector<32x64xf32>
    %cst_26 = arith.constant dense<0.000000e+00> : vector<64xf32>
    %45 = vector.multi_reduction <add>, %44, %cst_26 [0] : vector<32x64xf32> to vector<64xf32>
    %46 = vector.shape_cast %45 : vector<64xf32> to vector<1x64xf32>
    %47 = vector.broadcast %43 : vector<1x64xf32> to vector<4x64xf32>
    %48 = arith.mulf %41, %47 : vector<4x64xf32>
    %cst_27 = arith.constant dense<0.000000e+00> : vector<4xf32>
    %49 = vector.multi_reduction <add>, %48, %cst_27 [1] : vector<4x64xf32> to vector<4xf32>
    %50 = vector.shape_cast %49 : vector<4xf32> to vector<4x1xf32>
    %51 = vector.broadcast %46 : vector<1x64xf32> to vector<4x64xf32>
    %52 = arith.mulf %41, %51 : vector<4x64xf32>
    %cst_28 = arith.constant dense<0.000000e+00> : vector<4xf32>
    %53 = vector.multi_reduction <add>, %52, %cst_28 [1] : vector<4x64xf32> to vector<4xf32>
    %54 = vector.shape_cast %53 : vector<4xf32> to vector<4x1xf32>
    %cst_29 = arith.constant 5.120000e+02 : f32
    %55 = vector.broadcast %cst_29 : f32 to vector<4x1xf32>
    %56 = arith.divf %50, %55 : vector<4x1xf32>
    %cst_30 = arith.constant 5.120000e+02 : f32
    %57 = vector.broadcast %cst_30 : f32 to vector<4x1xf32>
    %58 = arith.divf %54, %57 : vector<4x1xf32>
    %59 = arith.mulf %56, %56 : vector<4x1xf32>
    %60 = arith.subf %58, %59 : vector<4x1xf32>
    %cst_31 = arith.constant 0.000000e+00 : f32
    %61 = vector.broadcast %cst_31 : f32 to vector<4x1xf32>
    %62 = arith.maximumf %60, %61 : vector<4x1xf32>
    %cst_32 = arith.constant 9.99999974E-6 : f32
    %63 = vector.broadcast %cst_32 : f32 to vector<4x1xf32>
    %64 = arith.addf %62, %63 : vector<4x1xf32>
    %65 = math.rsqrt %64 : vector<4x1xf32>
    %66 = arith.mulf %19, %65 : vector<4x1xf32>
    %67 = arith.mulf %56, %66 : vector<4x1xf32>
    %68 = arith.subf %20, %67 : vector<4x1xf32>
    %69 = vector.broadcast %66 : vector<4x1xf32> to vector<4x64xf32>
    %70 = arith.mulf %41, %69 : vector<4x64xf32>
    %cst_33 = arith.constant dense<0.000000e+00> : vector<64xf32>
    %71 = vector.multi_reduction <add>, %70, %cst_33 [0] : vector<4x64xf32> to vector<64xf32>
    %72 = vector.shape_cast %71 : vector<64xf32> to vector<1x64xf32>
    %73 = vector.broadcast %68 : vector<4x1xf32> to vector<4x64xf32>
    %74 = arith.mulf %41, %73 : vector<4x64xf32>
    %cst_34 = arith.constant dense<0.000000e+00> : vector<64xf32>
    %75 = vector.multi_reduction <add>, %74, %cst_34 [0] : vector<4x64xf32> to vector<64xf32>
    %76 = vector.shape_cast %75 : vector<64xf32> to vector<1x64xf32>
    %77 = vector.broadcast %72 : vector<1x64xf32> to vector<32x64xf32>
    %78 = arith.mulf %18, %77 : vector<32x64xf32>
    %79 = vector.broadcast %76 : vector<1x64xf32> to vector<32x64xf32>
    %80 = arith.addf %78, %79 : vector<32x64xf32>
    %cst_35 = arith.constant 0.000000e+00 : f32
    %81 = vector.broadcast %cst_35 : f32 to vector<32x64xf32>
    %82 = arith.maximumf %80, %81 : vector<32x64xf32>
    %cst_36 = arith.constant 0.000000e+00 : bf16
    %83 = vector.broadcast %cst_36 : bf16 to vector<2x1x64xbf16>
    %c0_37 = arith.constant 0 : index
    %c0_38 = arith.constant 0 : index
    %c0_39 = arith.constant 0 : index
    %84 = vector.load %arg9[%c0_37, %c0_38, %c0_39] : memref<2x18x64xbf16, #tpu.memory_space<vmem>>, vector<2x1x64xbf16>
    tpu.vector_store %arg9[%c0_37, %c0_38, %c0_39], %83 {strides = array<i32>} : memref<2x18x64xbf16, #tpu.memory_space<vmem>>, vector<2x1x64xbf16>,
    %c0_40 = arith.constant 0 : index
    %c17 = arith.constant 17 : index
    %c0_41 = arith.constant 0 : index
    %85 = vector.load %arg9[%c0_40, %c17, %c0_41] : memref<2x18x64xbf16, #tpu.memory_space<vmem>>, vector<2x1x64xbf16>
    tpu.vector_store %arg9[%c0_40, %c17, %c0_41], %83 {strides = array<i32>} : memref<2x18x64xbf16, #tpu.memory_space<vmem>>, vector<2x1x64xbf16>,
    %86 = arith.truncf %82 : vector<32x64xf32> to vector<32x64xbf16>
    %87 = vector.shape_cast %86 : vector<32x64xbf16> to vector<2x16x64xbf16>
    %c0_42 = arith.constant 0 : index
    %c1_43 = arith.constant 1 : index
    %c0_44 = arith.constant 0 : index
    %88 = vector.load %arg9[%c0_42, %c1_43, %c0_44] : memref<2x18x64xbf16, #tpu.memory_space<vmem>>, vector<2x16x64xbf16>
    tpu.vector_store %arg9[%c0_42, %c1_43, %c0_44], %87 {strides = array<i32>} : memref<2x18x64xbf16, #tpu.memory_space<vmem>>, vector<2x16x64xbf16>,
    %cst_45 = arith.constant 0.000000e+00 : f32
    %89 = vector.broadcast %cst_45 : f32 to vector<32x128xf32>
    %c0_46 = arith.constant 0 : index
    %c0_47 = arith.constant 0 : index
    %c0_48 = arith.constant 0 : index
    %90 = vector.load %arg9[%c0_46, %c0_47, %c0_48] : memref<2x18x64xbf16, #tpu.memory_space<vmem>>, vector<2x16x64xbf16>
    %91 = vector.shape_cast %90 : vector<2x16x64xbf16> to vector<32x64xbf16>
    %c0_49 = arith.constant 0 : index
    %c0_50 = arith.constant 0 : index
    %c0_51 = arith.constant 0 : index
    %92 = vector.load %arg4[%c0_49, %c0_50, %c0_51] : memref<3x64x128xbf16, #tpu.memory_space<vmem>>, vector<1x64x128xbf16>
    %93 = vector.shape_cast %92 : vector<1x64x128xbf16> to vector<64x128xbf16>
    %cst_52 = arith.constant dense<0.000000e+00> : vector<32x128xf32>
    %94 = tpu.matmul %91, %93, %cst_52 {dimension_numbers = #tpu.dot_dimension_numbers<[1], [0], [0], [1], [0, 0, 1, 1], [], []>} : vector<32x64xbf16>, vector<64x128xbf16>, vector<32x128xf32> -> vector<32x128xf32>
    %95 = arith.addf %89, %94 : vector<32x128xf32>
    %c0_53 = arith.constant 0 : index
    %c1_54 = arith.constant 1 : index
    %c0_55 = arith.constant 0 : index
    %96 = vector.load %arg9[%c0_53, %c1_54, %c0_55] : memref<2x18x64xbf16, #tpu.memory_space<vmem>>, vector<2x16x64xbf16>
    %97 = vector.shape_cast %96 : vector<2x16x64xbf16> to vector<32x64xbf16>
    %c1_56 = arith.constant 1 : index
    %c0_57 = arith.constant 0 : index
    %c0_58 = arith.constant 0 : index
    %98 = vector.load %arg4[%c1_56, %c0_57, %c0_58] : memref<3x64x128xbf16, #tpu.memory_space<vmem>>, vector<1x64x128xbf16>
    %99 = vector.shape_cast %98 : vector<1x64x128xbf16> to vector<64x128xbf16>
    %cst_59 = arith.constant dense<0.000000e+00> : vector<32x128xf32>
    %100 = tpu.matmul %97, %99, %cst_59 {dimension_numbers = #tpu.dot_dimension_numbers<[1], [0], [0], [1], [0, 0, 1, 1], [], []>} : vector<32x64xbf16>, vector<64x128xbf16>, vector<32x128xf32> -> vector<32x128xf32>
    %101 = arith.addf %95, %100 : vector<32x128xf32>
    %c0_60 = arith.constant 0 : index
    %c2_61 = arith.constant 2 : index
    %c0_62 = arith.constant 0 : index
    %102 = vector.load %arg9[%c0_60, %c2_61, %c0_62] : memref<2x18x64xbf16, #tpu.memory_space<vmem>>, vector<2x16x64xbf16>
    %103 = vector.shape_cast %102 : vector<2x16x64xbf16> to vector<32x64xbf16>
    %c2_63 = arith.constant 2 : index
    %c0_64 = arith.constant 0 : index
    %c0_65 = arith.constant 0 : index
    %104 = vector.load %arg4[%c2_63, %c0_64, %c0_65] : memref<3x64x128xbf16, #tpu.memory_space<vmem>>, vector<1x64x128xbf16>
    %105 = vector.shape_cast %104 : vector<1x64x128xbf16> to vector<64x128xbf16>
    %cst_66 = arith.constant dense<0.000000e+00> : vector<32x128xf32>
    %106 = tpu.matmul %103, %105, %cst_66 {dimension_numbers = #tpu.dot_dimension_numbers<[1], [0], [0], [1], [0, 0, 1, 1], [], []>} : vector<32x64xbf16>, vector<64x128xbf16>, vector<32x128xf32> -> vector<32x128xf32>
    %107 = arith.addf %101, %106 : vector<32x128xf32>
    %c0_67 = arith.constant 0 : index
    %c0_68 = arith.constant 0 : index
    %108 = vector.load %arg5[%c0_67, %c0_68] : memref<8x1xf32, #tpu.memory_space<vmem>>, vector<8x1xf32>
    %c0_69 = arith.constant 0 : index
    %c0_70 = arith.constant 0 : index
    %109 = vector.load %arg6[%c0_69, %c0_70] : memref<8x1xf32, #tpu.memory_space<vmem>>, vector<8x1xf32>
    %110 = tpu.iota {dimensions = array<i32: 1>} : vector<8x128xi32>
    %c8_i32 = arith.constant 8 : i32
    %c0_i32_71 = arith.constant 0 : i32
    %111 = arith.cmpi eq, %c8_i32, %c0_i32_71 : i32
    %c1_i32_72 = arith.constant 1 : i32
    %112 = arith.select %111, %c1_i32_72, %c8_i32 : i32
    %113 = vector.broadcast %112 : i32 to vector<8x128xi32>
    %114 = arith.remsi %110, %113 : vector<8x128xi32>
    %c0_i32_73 = arith.constant 0 : i32
    %115 = vector.broadcast %c0_i32_73 : i32 to vector<8x128xi32>
    %116 = arith.cmpi ne, %114, %115 : vector<8x128xi32>
    %c0_i32_74 = arith.constant 0 : i32
    %117 = vector.broadcast %c0_i32_74 : i32 to vector<8x128xi32>
    %118 = arith.cmpi slt, %114, %117 : vector<8x128xi32>
    %c0_i32_75 = arith.constant 0 : i32
    %119 = arith.cmpi slt, %112, %c0_i32_75 : i32
    %120 = vector.broadcast %119 : i1 to vector<8x128xi1>
    %121 = vector.broadcast %120 : vector<8x128xi1> to vector<8x128xi1>
    %122 = arith.xori %118, %121 : vector<8x128xi1>
    %123 = arith.andi %122, %116 : vector<8x128xi1>
    %124 = vector.broadcast %112 : i32 to vector<8x128xi32>
    %125 = arith.addi %114, %124 : vector<8x128xi32>
    %126 = arith.select %123, %125, %114 : vector<8x128xi1>, vector<8x128xi32>
    %127 = tpu.iota {dimensions = array<i32: 0>} : vector<8x128xi32>
    %128 = arith.cmpi eq, %126, %127 : vector<8x128xi32>
    %129 = arith.extui %128 : vector<8x128xi1> to vector<8x128xi32>
    %130 = arith.sitofp %129 : vector<8x128xi32> to vector<8x128xf32>
    %cst_76 = arith.constant dense<0.000000e+00> : vector<128xf32>
    %131 = vector.multi_reduction <add>, %107, %cst_76 [0] : vector<32x128xf32> to vector<128xf32>
    %132 = vector.shape_cast %131 : vector<128xf32> to vector<1x128xf32>
    %133 = arith.mulf %107, %107 : vector<32x128xf32>
    %cst_77 = arith.constant dense<0.000000e+00> : vector<128xf32>
    %134 = vector.multi_reduction <add>, %133, %cst_77 [0] : vector<32x128xf32> to vector<128xf32>
    %135 = vector.shape_cast %134 : vector<128xf32> to vector<1x128xf32>
    %136 = vector.broadcast %132 : vector<1x128xf32> to vector<8x128xf32>
    %137 = arith.mulf %130, %136 : vector<8x128xf32>
    %cst_78 = arith.constant dense<0.000000e+00> : vector<8xf32>
    %138 = vector.multi_reduction <add>, %137, %cst_78 [1] : vector<8x128xf32> to vector<8xf32>
    %139 = vector.shape_cast %138 : vector<8xf32> to vector<8x1xf32>
    %140 = vector.broadcast %135 : vector<1x128xf32> to vector<8x128xf32>
    %141 = arith.mulf %130, %140 : vector<8x128xf32>
    %cst_79 = arith.constant dense<0.000000e+00> : vector<8xf32>
    %142 = vector.multi_reduction <add>, %141, %cst_79 [1] : vector<8x128xf32> to vector<8xf32>
    %143 = vector.shape_cast %142 : vector<8xf32> to vector<8x1xf32>
    %cst_80 = arith.constant 5.120000e+02 : f32
    %144 = vector.broadcast %cst_80 : f32 to vector<8x1xf32>
    %145 = arith.divf %139, %144 : vector<8x1xf32>
    %cst_81 = arith.constant 5.120000e+02 : f32
    %146 = vector.broadcast %cst_81 : f32 to vector<8x1xf32>
    %147 = arith.divf %143, %146 : vector<8x1xf32>
    %148 = arith.mulf %145, %145 : vector<8x1xf32>
    %149 = arith.subf %147, %148 : vector<8x1xf32>
    %cst_82 = arith.constant 0.000000e+00 : f32
    %150 = vector.broadcast %cst_82 : f32 to vector<8x1xf32>
    %151 = arith.maximumf %149, %150 : vector<8x1xf32>
    %cst_83 = arith.constant 9.99999974E-6 : f32
    %152 = vector.broadcast %cst_83 : f32 to vector<8x1xf32>
    %153 = arith.addf %151, %152 : vector<8x1xf32>
    %154 = math.rsqrt %153 : vector<8x1xf32>
    %155 = arith.mulf %108, %154 : vector<8x1xf32>
    %156 = arith.mulf %145, %155 : vector<8x1xf32>
    %157 = arith.subf %109, %156 : vector<8x1xf32>
    %158 = vector.broadcast %155 : vector<8x1xf32> to vector<8x128xf32>
    %159 = arith.mulf %130, %158 : vector<8x128xf32>
    %cst_84 = arith.constant dense<0.000000e+00> : vector<128xf32>
    %160 = vector.multi_reduction <add>, %159, %cst_84 [0] : vector<8x128xf32> to vector<128xf32>
    %161 = vector.shape_cast %160 : vector<128xf32> to vector<1x128xf32>
    %162 = vector.broadcast %157 : vector<8x1xf32> to vector<8x128xf32>
    %163 = arith.mulf %130, %162 : vector<8x128xf32>
    %cst_85 = arith.constant dense<0.000000e+00> : vector<128xf32>
    %164 = vector.multi_reduction <add>, %163, %cst_85 [0] : vector<8x128xf32> to vector<128xf32>
    %165 = vector.shape_cast %164 : vector<128xf32> to vector<1x128xf32>
    %166 = vector.broadcast %161 : vector<1x128xf32> to vector<32x128xf32>
    %167 = arith.mulf %107, %166 : vector<32x128xf32>
    %168 = vector.broadcast %165 : vector<1x128xf32> to vector<32x128xf32>
    %169 = arith.addf %167, %168 : vector<32x128xf32>
    %c0_86 = arith.constant 0 : index
    %c1_87 = arith.constant 1 : index
    %c0_88 = arith.constant 0 : index
    %170 = vector.load %arg0[%c0_86, %c1_87, %c0_88] : memref<2x18x64xbf16, #tpu.memory_space<vmem>>, vector<2x16x64xbf16>
    %171 = vector.shape_cast %170 : vector<2x16x64xbf16> to vector<32x64xbf16>
    %c0_89 = arith.constant 0 : index
    %c0_90 = arith.constant 0 : index
    %172 = vector.load %arg7[%c0_89, %c0_90] : memref<64x128xbf16, #tpu.memory_space<vmem>>, vector<64x128xbf16>
    %cst_91 = arith.constant dense<0.000000e+00> : vector<32x128xf32>
    %173 = tpu.matmul %171, %172, %cst_91 {dimension_numbers = #tpu.dot_dimension_numbers<[1], [0], [0], [1], [0, 0, 1, 1], [], []>} : vector<32x64xbf16>, vector<64x128xbf16>, vector<32x128xf32> -> vector<32x128xf32>
    %174 = arith.addf %169, %173 : vector<32x128xf32>
    %cst_92 = arith.constant 0.000000e+00 : f32
    %175 = vector.broadcast %cst_92 : f32 to vector<32x128xf32>
    %176 = arith.maximumf %174, %175 : vector<32x128xf32>
    %c0_93 = arith.constant 0 : index
    %c0_94 = arith.constant 0 : index
    %177 = vector.load %arg8[%c0_93, %c0_94] : memref<32x128xf32, #tpu.memory_space<vmem>>, vector<32x128xf32>
    tpu.vector_store %arg8[%c0_93, %c0_94], %176 {strides = array<i32>} : memref<32x128xf32, #tpu.memory_space<vmem>>, vector<32x128xf32>,
    return
  }
}

</mosaic_0001>

<llo_original>
// kernel: tpu_custom_call.1
$region0: #{tpu_custom_call.1}
  #allocation0 [shape = 'u32[]', space=smem, size = 0x4, offset = 0x4, fixed_abs, tag = 'smem constant byte address 0x4 - core index']
  #allocation1 [shape = 'u32[144,128]{1,0:T(1,128)}', space=vmem, size = 0x12000, scoped, tag = 'internal scratch']
  #allocation2 [shape = 'bf16[2,18,64]{2,1,0:T(8,128)(2,1)}', space=vmem, size = 0x3000, scoped, tag = 'scratch operand']
  %s0 = inlined_call_operand.vmem [shape: bf16[2,18,64], index: 0, kind: input, shape index: {}]
  %s1 = inlined_call_operand.hbm [shape: bf16[3,64,64], index: 1, kind: input, shape index: {}]
  %s2 = inlined_call_operand.vmem [shape: f32[4,1], index: 2, kind: input, shape index: {}]
  %s3 = inlined_call_operand.vmem [shape: f32[4,1], index: 3, kind: input, shape index: {}]
  %s4 = inlined_call_operand.hbm [shape: bf16[3,64,128], index: 4, kind: input, shape index: {}]
  %s5 = inlined_call_operand.vmem [shape: f32[8,1], index: 5, kind: input, shape index: {}]
  %s6 = inlined_call_operand.vmem [shape: f32[8,1], index: 6, kind: input, shape index: {}]
  %s7 = inlined_call_operand.vmem [shape: bf16[64,128], index: 7, kind: input, shape index: {}]
  %s8 = inlined_call_operand.hbm [shape: f32[32,128], index: 8, kind: output, shape index: {}]
  %s9 = sld [smem:[#allocation0]]
  $region50: #{tpu_custom_call.1} parent=0
    _
  %s11 = ssub.s32 1, %s9
  %s12 = scalar_select 0, %s11, %s9
  $region1: #{tpu_custom_call.1} parent=0
    #allocation3 [shape = 'u8[49152]{0}', space=vmem, size = 0xc000, scoped, tag = 'input window, operand 1, single buffered']
    #allocation4 [shape = 's32[1]{0}', space=sflag, size = 0x4, scoped, tag = 'scoped memory for tpu_custom_call.1']
    #allocation5 [shape = 's32[1]{0}', space=sflag, size = 0x4, scoped, tag = 'scoped memory for tpu_custom_call.1']
    #allocation6 [shape = 'u8[49152]{0}', space=vmem, size = 0xc000, scoped, tag = 'input window, operand 4, single buffered']
    #allocation7 [shape = 's32[1]{0}', space=sflag, size = 0x4, scoped, tag = 'scoped memory for tpu_custom_call.1']
    #allocation8 [shape = 'u8[16384]{0}', space=vmem, size = 0x4000, scoped, tag = 'output window, operand 0, single buffered']
    %13 = vsyncpa [#allocation4], 0
    %14 = vsyncpa [#allocation7], 0
    %15 = vsyncpa [#allocation5], 0
    // Predicated region
    $region2: #{tpu_custom_call.1} parent=1 // pred_check
      _
    $region3: #{tpu_custom_call.1} parent=1 // pred_check_branch
      %17 = sbr.rel (0) target = $region5
    $region4: #{tpu_custom_call.1} parent=1 // pred_region
      _
    $region5: #{tpu_custom_call.1} parent=1 // pred_fallthru
      _
    // Predicated region
    $region6: #{tpu_custom_call.1} parent=1 // pred_check
      _
    $region7: #{tpu_custom_call.1} parent=1 // pred_check_branch
      %19 = sbr.rel (0) target = $region9
    $region8: #{tpu_custom_call.1} parent=1 // pred_region
      %s21 = ssub.s32 1536, 1536
      %22 = vsyncadd [#allocation4], %s21
      %s23 = sshll.u32 [#allocation3], 4
      %s24 = int_to_ptr.vmem [resolvable:$true] %s23
      %29 = dma.hbm_to_vmem [thread:$0]  %s1, 1536, %s24, [#allocation4], 64, 64, 4
    $region9: #{tpu_custom_call.1} parent=1 // pred_fallthru
      _
    // Predicated region
    $region10: #{tpu_custom_call.1} parent=1 // pred_check
      _
    $region11: #{tpu_custom_call.1} parent=1 // pred_check_branch
      %31 = sbr.rel (0) target = $region13
    $region12: #{tpu_custom_call.1} parent=1 // pred_region
      _
    $region13: #{tpu_custom_call.1} parent=1 // pred_fallthru
      _
    // Predicated region
    $region14: #{tpu_custom_call.1} parent=1 // pred_check
      _
    $region15: #{tpu_custom_call.1} parent=1 // pred_check_branch
      %33 = sbr.rel (0) target = $region17
    $region16: #{tpu_custom_call.1} parent=1 // pred_region
      _
    $region17: #{tpu_custom_call.1} parent=1 // pred_fallthru
      _
    // Predicated region
    $region18: #{tpu_custom_call.1} parent=1 // pred_check
      _
    $region19: #{tpu_custom_call.1} parent=1 // pred_check_branch
      %35 = sbr.rel (0) target = $region21
    $region20: #{tpu_custom_call.1} parent=1 // pred_region
      %s37 = ssub.s32 1536, 1536
      %38 = vsyncadd [#allocation7], %s37
      %s39 = sshll.u32 [#allocation6], 4
      %s40 = int_to_ptr.vmem [resolvable:$true] %s39
      %45 = dma.hbm_to_vmem [thread:$0]  %s4, 1536, %s40, [#allocation7], 64, 64, 4
    $region21: #{tpu_custom_call.1} parent=1 // pred_fallthru
      _
    // Predicated region
    $region22: #{tpu_custom_call.1} parent=1 // pred_check
      _
    $region23: #{tpu_custom_call.1} parent=1 // pred_check_branch
      %47 = sbr.rel (0) target = $region25
    $region24: #{tpu_custom_call.1} parent=1 // pred_region
      _
    $region25: #{tpu_custom_call.1} parent=1 // pred_fallthru
      _
    // Predicated region
    $region26: #{tpu_custom_call.1} parent=1 // pred_check
      _
    $region27: #{tpu_custom_call.1} parent=1 // pred_check_branch
      %49 = sbr.rel (0) target = $region29
    $region28: #{tpu_custom_call.1} parent=1 // pred_region
      _
    $region29: #{tpu_custom_call.1} parent=1 // pred_fallthru
      _
    // Predicated region
    $region30: #{tpu_custom_call.1} parent=1 // pred_check
      _
    $region31: #{tpu_custom_call.1} parent=1 // pred_check_branch
      %51 = sbr.rel (0) target = $region33
    $region32: #{tpu_custom_call.1} parent=1 // pred_region
      _
    $region33: #{tpu_custom_call.1} parent=1 // pred_fallthru
      _
    // Predicated region
    $region34: #{tpu_custom_call.1} parent=1 // pred_check
      _
    $region35: #{tpu_custom_call.1} parent=1 // pred_check_branch
      %53 = sbr.rel (0) target = $region37
    $region36: #{tpu_custom_call.1} parent=1 // pred_region
      %54 = dma.done [#allocation4], 1536
    $region37: #{tpu_custom_call.1} parent=1 // pred_fallthru
      _
    // Predicated region
    $region38: #{tpu_custom_call.1} parent=1 // pred_check
      _
    $region39: #{tpu_custom_call.1} parent=1 // pred_check_branch
      %56 = sbr.rel (0) target = $region41
    $region40: #{tpu_custom_call.1} parent=1 // pred_region
      %57 = dma.done [#allocation7], 1536
    $region41: #{tpu_custom_call.1} parent=1 // pred_fallthru
      _
    %v59 = vld [vmem:[%s0] sm:$0xf]
    %v60 = vld [vmem:[%s0 + $0x4] sm:$0xf]
    %v61 = vld [vmem:[%s0 + $0xc] sm:$0xf]
    %v62 = vld [vmem:[%s0 + $0x10] sm:$0xf]
    %v63 = vld [vmem:[#allocation3] sm:$0xf]
    %v64 = vld [vmem:[#allocation3 + $0x4] sm:$0xf]
    %v65 = vld [vmem:[#allocation3 + $0x8] sm:$0xf]
    %v66 = vld [vmem:[#allocation3 + $0xc] sm:$0xf]
    %v67 = vld [vmem:[#allocation3 + $0x10] sm:$0xf]
    %v68 = vld [vmem:[#allocation3 + $0x14] sm:$0xf]
    %v69 = vld [vmem:[#allocation3 + $0x18] sm:$0xf]
    %v70 = vld [vmem:[#allocation3 + $0x1c] sm:$0xf]
    %v71 = vld [vmem:[%s0 + $0x8] sm:$0x1]
    %v72 = vld [vmem:[%s0 + $0x14] sm:$0x1]
    %vm73 = vsmask.f32 3328
    %vm74 = vsmask.f32 7440
    %vm75 = vmor %vm73, %vm74
    %v77 = vshrl.u32 %v59, 16
    %v79 = vrot.slane %v77, 4
    %v80 = vshll.u32 %v59, 16
    %v82 = vrot.slane %v80, 5
    %v83 = vor.u32 %v79, %v82
    %v84 = vrot.slane %v83, 4
    %v86 = vshll.u32 %v60, 16
    %v88 = vrot.slane %v86, 5
    %v89 = vsel %vm75, %v84, %v88
    %v90 = vshrl.u32 %v60, 16
    %v92 = vrot.slane %v90, 4
    %v93 = vor.u32 %v92, %v88
    %v94 = vrot.slane %v93, 4
    %v96 = vshll.u32 %v71, 16
    %v98 = vrot.slane %v96, 5
    %v99 = vsel %vm75, %v94, %v98
    %v101 = vshrl.u32 %v61, 16
    %v103 = vrot.slane %v101, 4
    %v104 = vshll.u32 %v61, 16
    %v106 = vrot.slane %v104, 5
    %v107 = vor.u32 %v103, %v106
    %v108 = vrot.slane %v107, 4
    %v110 = vshll.u32 %v62, 16
    %v112 = vrot.slane %v110, 5
    %v113 = vsel %vm75, %v108, %v112
    %v114 = vshrl.u32 %v62, 16
    %v116 = vrot.slane %v114, 4
    %v117 = vor.u32 %v116, %v112
    %v118 = vrot.slane %v117, 4
    %v120 = vshll.u32 %v72, 16
    %v122 = vrot.slane %v120, 5
    %v123 = vsel %vm75, %v118, %v122
    %s124 = scalar_lea.vmem [#allocation3], 32
    %v125 = vld [vmem:[%s124] sm:$0xf]
    %v126 = vld [vmem:[%s124 + $0x4] sm:$0xf]
    %v127 = vld [vmem:[%s124 + $0x8] sm:$0xf]
    %v128 = vld [vmem:[%s124 + $0xc] sm:$0xf]
    %v129 = vld [vmem:[%s124 + $0x10] sm:$0xf]
    %v130 = vld [vmem:[%s124 + $0x14] sm:$0xf]
    %v131 = vld [vmem:[%s124 + $0x18] sm:$0xf]
    %v132 = vld [vmem:[%s124 + $0x1c] sm:$0xf]
    %v133 = vunpack.c.l.b16 %v89
    %v134 = vunpack.c.l.b16 %v99
    %v135 = vunpack.c.l.b16 %v113
    %v136 = vunpack.c.l.b16 %v123
    %v137 = vpack.c.b16 %v134, %v133
    %v138 = vpack.c.b16 %v136, %v135
    %v147 = vunpack.c.l.b16 %v125
    %v148 = vunpack.c.l.b16 %v126
    %v149 = vunpack.c.l.b16 %v127
    %v150 = vunpack.c.l.b16 %v128
    %v151 = vunpack.c.l.b16 %v129
    %v152 = vunpack.c.l.b16 %v130
    %v153 = vunpack.c.l.b16 %v131
    %v154 = vunpack.c.l.b16 %v132
    %v155 = vpack.c.b16 %v148, %v147
    %v156 = vpack.c.b16 %v150, %v149
    %v157 = vpack.c.b16 %v152, %v151
    %v158 = vpack.c.b16 %v154, %v153
    %vm163 = vcmask 523264
    %v165 = vsel %vm163, %v137, 0
    %v168 = vsel %vm163, %v138, 0
    %170 = vmatprep.subr.bf16.mxu0 0
    %171 = vmatpush1.bf16.msra.mxu0 %v155
    %172 = vmatprep.subr.bf16.mxu0 0
    %173 = vmatpush1.bf16.msra.mxu0 %v156
    %174 = vmatprep.subr.bf16.mxu0 0
    %175 = vmatpush1.bf16.msra.mxu0 %v157
    %176 = vmatprep.subr.bf16.mxu0 0
    %177 = vmatpush1.bf16.msra.mxu0 %v158
    %178 = vmatprep.subr.bf16.mxu0 0
    %179 = vmatpush1.bf16.msra.mxu0 0
    %180 = vmatprep.subr.bf16.mxu0 0
    %181 = vmatpush1.bf16.msra.mxu0 0
    %182 = vmatprep.subr.bf16.mxu0 0
    %183 = vmatpush1.bf16.msra.mxu0 0
    %184 = vmatprep.subr.bf16.mxu0 0
    %185 = vmatpush1.bf16.msra.mxu0 0
    %186 = vmatprep.subr.bf16.mxu0 0
    %187 = vmatpush1.bf16.msra.mxu0 0
    %188 = vmatprep.subr.bf16.mxu0 0
    %189 = vmatpush1.bf16.msra.mxu0 0
    %190 = vmatprep.subr.bf16.mxu0 0
    %191 = vmatpush1.bf16.msra.mxu0 0
    %192 = vmatprep.subr.bf16.mxu0 0
    %193 = vmatpush1.bf16.msra.mxu0 0
    %194 = vmatprep.subr.bf16.mxu0 0
    %195 = vmatpush1.bf16.msra.mxu0 0
    %196 = vmatprep.subr.bf16.mxu0 0
    %197 = vmatpush1.bf16.msra.mxu0 0
    %198 = vmatprep.subr.bf16.mxu0 0
    %199 = vmatpush1.bf16.msra.mxu0 0
    %200 = vmatprep.subr.bf16.mxu0 0
    %201 = vmatpush1.bf16.msra.mxu0 0
    %202 = vmatprep.mubr.bf16.mxu0 0
    %203 = vmatmul.mubr.bf16.gmra.mrb[0].mxu0 %v165
    %v204 = vpop.f32.mrb[0].mxu0
    %v205 = vadd.f32 0.0, %v204
    %v206 = vpop.f32.mrb[0].mxu0
    %v207 = vpop.f32.mrb[0].mxu0
    %v208 = vadd.f32 0.0, %v207
    %v209 = vpop.f32.mrb[0].mxu0
    %210 = vmatprep.mubr.bf16.mxu0 0
    %211 = vmatmul.mubr.bf16.gmra.mrb[0].mxu0 %v168
    %v212 = vpop.f32.mrb[0].mxu0
    %v213 = vadd.f32 0.0, %v212
    %v214 = vpop.f32.mrb[0].mxu0
    %v215 = vpop.f32.mrb[0].mxu0
    %v216 = vadd.f32 0.0, %v215
    %v217 = vpop.f32.mrb[0].mxu0
    %218 = vdwg.mxu0
    %v223 = vunpack.c.l.b16 %v59
    %v224 = vunpack.c.l.b16 %v60
    %v225 = vunpack.c.l.b16 %v61
    %v226 = vunpack.c.l.b16 %v62
    %v227 = vpack.c.b16 %v224, %v223
    %v228 = vpack.c.b16 %v226, %v225
    %v237 = vunpack.c.l.b16 %v63
    %v238 = vunpack.c.l.b16 %v64
    %v239 = vunpack.c.l.b16 %v65
    %v240 = vunpack.c.l.b16 %v66
    %v241 = vunpack.c.l.b16 %v67
    %v242 = vunpack.c.l.b16 %v68
    %v243 = vunpack.c.l.b16 %v69
    %v244 = vunpack.c.l.b16 %v70
    %v245 = vpack.c.b16 %v238, %v237
    %v246 = vpack.c.b16 %v240, %v239
    %v247 = vpack.c.b16 %v242, %v241
    %v248 = vpack.c.b16 %v244, %v243
    %v254 = vsel %vm163, %v227, 0
    %v257 = vsel %vm163, %v228, 0
    %259 = vmatprep.subr.bf16.mxu0 0
    %260 = vmatpush1.bf16.msra.mxu0 %v245
    %261 = vmatprep.subr.bf16.mxu0 0
    %262 = vmatpush1.bf16.msra.mxu0 %v246
    %263 = vmatprep.subr.bf16.mxu0 0
    %264 = vmatpush1.bf16.msra.mxu0 %v247
    %265 = vmatprep.subr.bf16.mxu0 0
    %266 = vmatpush1.bf16.msra.mxu0 %v248
    %267 = vmatprep.subr.bf16.mxu0 0
    %268 = vmatpush1.bf16.msra.mxu0 0
    %269 = vmatprep.subr.bf16.mxu0 0
    %270 = vmatpush1.bf16.msra.mxu0 0
    %271 = vmatprep.subr.bf16.mxu0 0
    %272 = vmatpush1.bf16.msra.mxu0 0
    %273 = vmatprep.subr.bf16.mxu0 0
    %274 = vmatpush1.bf16.msra.mxu0 0
    %275 = vmatprep.subr.bf16.mxu0 0
    %276 = vmatpush1.bf16.msra.mxu0 0
    %277 = vmatprep.subr.bf16.mxu0 0
    %278 = vmatpush1.bf16.msra.mxu0 0
    %279 = vmatprep.subr.bf16.mxu0 0
    %280 = vmatpush1.bf16.msra.mxu0 0
    %281 = vmatprep.subr.bf16.mxu0 0
    %282 = vmatpush1.bf16.msra.mxu0 0
    %283 = vmatprep.subr.bf16.mxu0 0
    %284 = vmatpush1.bf16.msra.mxu0 0
    %285 = vmatprep.subr.bf16.mxu0 0
    %286 = vmatpush1.bf16.msra.mxu0 0
    %287 = vmatprep.subr.bf16.mxu0 0
    %288 = vmatpush1.bf16.msra.mxu0 0
    %289 = vmatprep.subr.bf16.mxu0 0
    %290 = vmatpush1.bf16.msra.mxu0 0
    %291 = vmatprep.mubr.bf16.mxu0 0
    %292 = vmatmul.mubr.bf16.gmra.mrb[0].mxu0 %v254
    %v293 = vpop.f32.mrb[0].mxu0
    %v294 = vadd.f32 %v205, %v293
    %v295 = vpop.f32.mrb[0].mxu0
    %v296 = vpop.f32.mrb[0].mxu0
    %v297 = vadd.f32 %v208, %v296
    %v298 = vpop.f32.mrb[0].mxu0
    %299 = vmatprep.mubr.bf16.mxu0 0
    %300 = vmatmul.mubr.bf16.gmra.mrb[0].mxu0 %v257
    %v301 = vpop.f32.mrb[0].mxu0
    %v302 = vadd.f32 %v213, %v301
    %v303 = vpop.f32.mrb[0].mxu0
    %v304 = vpop.f32.mrb[0].mxu0
    %v305 = vadd.f32 %v216, %v304
    %v306 = vpop.f32.mrb[0].mxu0
    %307 = vdwg.mxu0
    %v308 = vld [vmem:[%s0] sm:$0xe]
    %v309 = vld [vmem:[%s0 + $0xc] sm:$0xe]
    %vm314 = vcmask 1042432
    %vm315 = vcmask 1046532
    %vm316 = vmor %vm314, %vm315
    %v317 = vrot.slane %v308, 5
    %v318 = vrot.slane %v317, 4
    %v319 = vrot.slane %v60, 5
    %v320 = vsel %vm316, %v318, %v319
    %v321 = vrot.slane %v319, 4
    %v322 = vrot.slane %v71, 5
    %v323 = vsel %vm316, %v321, %v322
    %v324 = vrot.slane %v309, 5
    %v325 = vrot.slane %v324, 4
    %v326 = vrot.slane %v62, 5
    %v327 = vsel %vm316, %v325, %v326
    %v328 = vrot.slane %v326, 4
    %v329 = vrot.slane %v72, 5
    %v330 = vsel %vm316, %v328, %v329
    %s331 = scalar_lea.vmem [#allocation3], 64
    %v332 = vld [vmem:[%s331] sm:$0xf]
    %v333 = vld [vmem:[%s331 + $0x4] sm:$0xf]
    %v334 = vld [vmem:[%s331 + $0x8] sm:$0xf]
    %v335 = vld [vmem:[%s331 + $0xc] sm:$0xf]
    %v336 = vld [vmem:[%s331 + $0x10] sm:$0xf]
    %v337 = vld [vmem:[%s331 + $0x14] sm:$0xf]
    %v338 = vld [vmem:[%s331 + $0x18] sm:$0xf]
    %v339 = vld [vmem:[%s331 + $0x1c] sm:$0xf]
    %v340 = vunpack.c.l.b16 %v320
    %v341 = vunpack.c.l.b16 %v323
    %v342 = vunpack.c.l.b16 %v327
    %v343 = vunpack.c.l.b16 %v330
    %v344 = vpack.c.b16 %v341, %v340
    %v345 = vpack.c.b16 %v343, %v342
    %v354 = vunpack.c.l.b16 %v332
    %v355 = vunpack.c.l.b16 %v333
    %v356 = vunpack.c.l.b16 %v334
    %v357 = vunpack.c.l.b16 %v335
    %v358 = vunpack.c.l.b16 %v336
    %v359 = vunpack.c.l.b16 %v337
    %v360 = vunpack.c.l.b16 %v338
    %v361 = vunpack.c.l.b16 %v339
    %v362 = vpack.c.b16 %v355, %v354
    %v363 = vpack.c.b16 %v357, %v356
    %v364 = vpack.c.b16 %v359, %v358
    %v365 = vpack.c.b16 %v361, %v360
    %v371 = vsel %vm163, %v344, 0
    %v374 = vsel %vm163, %v345, 0
    %376 = vmatprep.subr.bf16.mxu0 0
    %377 = vmatpush1.bf16.msra.mxu0 %v362
    %378 = vmatprep.subr.bf16.mxu0 0
    %379 = vmatpush1.bf16.msra.mxu0 %v363
    %380 = vmatprep.subr.bf16.mxu0 0
    %381 = vmatpush1.bf16.msra.mxu0 %v364
    %382 = vmatprep.subr.bf16.mxu0 0
    %383 = vmatpush1.bf16.msra.mxu0 %v365
    %384 = vmatprep.subr.bf16.mxu0 0
    %385 = vmatpush1.bf16.msra.mxu0 0
    %386 = vmatprep.subr.bf16.mxu0 0
    %387 = vmatpush1.bf16.msra.mxu0 0
    %388 = vmatprep.subr.bf16.mxu0 0
    %389 = vmatpush1.bf16.msra.mxu0 0
    %390 = vmatprep.subr.bf16.mxu0 0
    %391 = vmatpush1.bf16.msra.mxu0 0
    %392 = vmatprep.subr.bf16.mxu0 0
    %393 = vmatpush1.bf16.msra.mxu0 0
    %394 = vmatprep.subr.bf16.mxu0 0
    %395 = vmatpush1.bf16.msra.mxu0 0
    %396 = vmatprep.subr.bf16.mxu0 0
    %397 = vmatpush1.bf16.msra.mxu0 0
    %398 = vmatprep.subr.bf16.mxu0 0
    %399 = vmatpush1.bf16.msra.mxu0 0
    %400 = vmatprep.subr.bf16.mxu0 0
    %401 = vmatpush1.bf16.msra.mxu0 0
    %402 = vmatprep.subr.bf16.mxu0 0
    %403 = vmatpush1.bf16.msra.mxu0 0
    %404 = vmatprep.subr.bf16.mxu0 0
    %405 = vmatpush1.bf16.msra.mxu0 0
    %406 = vmatprep.subr.bf16.mxu0 0
    %407 = vmatpush1.bf16.msra.mxu0 0
    %408 = vmatprep.mubr.bf16.mxu0 0
    %409 = vmatmul.mubr.bf16.gmra.mrb[0].mxu0 %v371
    %v410 = vpop.f32.mrb[0].mxu0
    %v411 = vadd.f32 0.0, %v410
    %v412 = vpop.f32.mrb[0].mxu0
    %v413 = vpop.f32.mrb[0].mxu0
    %v414 = vadd.f32 0.0, %v413
    %v415 = vpop.f32.mrb[0].mxu0
    %416 = vmatprep.mubr.bf16.mxu0 0
    %417 = vmatmul.mubr.bf16.gmra.mrb[0].mxu0 %v374
    %v418 = vpop.f32.mrb[0].mxu0
    %v419 = vadd.f32 0.0, %v418
    %v420 = vpop.f32.mrb[0].mxu0
    %v421 = vpop.f32.mrb[0].mxu0
    %v422 = vadd.f32 0.0, %v421
    %v423 = vpop.f32.mrb[0].mxu0
    %424 = vdwg.mxu0
    %v425 = vadd.f32 %v294, %v411
    %v426 = vadd.f32 %v297, %v414
    %v427 = vadd.f32 %v302, %v419
    %v428 = vadd.f32 %v305, %v422
    %v429 = vld [vmem:[%s2] sm:$0xf]
    %v430 = vld [vmem:[%s3] sm:$0xf]
    %v431 = vlaneseq
    %v432 = vand.u32 %v431, 127
    %vm433 = vcmp.lt.s32.totalorder %v432, 0
    %v434 = vsub.s32 0, %v432
    %v435 = vsel %vm433, %v434, %v432
    %v436 = vshrl.u32 %v435, 2
    %v437 = vand.u32 %v435, 3
    %v438 = vsub.s32 0, %v437
    %v439 = vsel %vm433, %v438, %v437
    %vm440 = vcmp.ne.s32.totalorder %v439, 0
    %vm441 = vcmp.lt.s32.totalorder %v439, 0
    %vm442 = vmand %vm441, %vm440
    %v443 = vadd.s32 %v439, 4
    %v444 = vsel %vm442, %v443, %v439
    %v445 = vlaneseq
    %v446 = vshrl.u32 %v445, 7
    %vm447 = vcmp.eq.s32.totalorder %v444, %v446
    %v448 = vsel %vm447, 1, 0
    %v449 = vcvt.s32.f32 %v448
    %v450 = vsel %vm163, %v425, 0.0
    %v451 = vsel %vm163, %v426, 0.0
    %v452 = vadd.f32 %v450, %v451
    %v453 = vsel %vm163, %v427, 0.0
    %v454 = vadd.f32 %v452, %v453
    %v455 = vsel %vm163, %v428, 0.0
    %v456 = vadd.f32 %v454, %v455
    %v457 = vrot.slane %v456, 4
    %v458 = vadd.f32 %v456, %v457
    %v459 = vrot.slane %v458, 2
    %v460 = vadd.f32 %v458, %v459
    %v461 = vrot.slane %v460, 1
    %v462 = vadd.f32 %v460, %v461
    %v463 = vmul.f32 %v425, %v425
    %v464 = vmul.f32 %v426, %v426
    %v465 = vmul.f32 %v427, %v427
    %v466 = vmul.f32 %v428, %v428
    %v467 = vsel %vm163, %v463, 0.0
    %v468 = vsel %vm163, %v464, 0.0
    %v469 = vadd.f32 %v467, %v468
    %v470 = vsel %vm163, %v465, 0.0
    %v471 = vadd.f32 %v469, %v470
    %v472 = vsel %vm163, %v466, 0.0
    %v473 = vadd.f32 %v471, %v472
    %v474 = vrot.slane %v473, 4
    %v475 = vadd.f32 %v473, %v474
    %v476 = vrot.slane %v475, 2
    %v477 = vadd.f32 %v475, %v476
    %v478 = vrot.slane %v477, 1
    %v479 = vadd.f32 %v477, %v478
    %v480 = vmul.f32 %v449, %v462
    %vm481 = vcmask 519168
    %v482 = vsel %vm481, %v480, 0.0
    %483 = vadd.xlane.f32.xlu0 %v482
    %v484 = vpop.xlane.xlu0 %483
    %v485 = vmul.f32 %v449, %v479
    %v486 = vsel %vm481, %v485, 0.0
    %487 = vadd.xlane.f32.xlu0 %v486
    %v488 = vpop.xlane.xlu0 %487
    %v489 = vrcp.pop 512.0
    %v490 = vmul.f32 %v484, %v489
    %v491 = vmul.f32 %v488, %v489
    %v492 = vmul.f32 %v490, %v490
    %v493 = vsub.f32 %v491, %v492
    %v494 = vmax.f32 %v493, 0.0
    %v495 = vadd.f32 %v494, 1e-05
    %v496 = vrsqrt.pop %v495
    %v497 = vmul.f32 %v429, %v496
    %v498 = vmul.f32 %v490, %v497
    %v499 = vsub.f32 %v430, %v498
    %501 = vset.pattern.permute.xlu0 0
    %502 = vperm.xlu0 %501, %v497
    %v503 = vpop.permute.xlu0 %502
    %v505 = vmul.f32 %v449, %v503
    %v506 = vsel %vm481, %v505, 0.0
    %v507 = vrot.slane %v506, 4
    %v508 = vadd.f32 %v506, %v507
    %v509 = vrot.slane %v508, 2
    %v510 = vadd.f32 %v508, %v509
    %v511 = vrot.slane %v510, 1
    %v512 = vadd.f32 %v510, %v511
    %514 = vset.pattern.permute.xlu0 0
    %515 = vperm.xlu0 %514, %v499
    %v516 = vpop.permute.xlu0 %515
    %v518 = vmul.f32 %v449, %v516
    %v519 = vsel %vm481, %v518, 0.0
    %v520 = vrot.slane %v519, 4
    %v521 = vadd.f32 %v519, %v520
    %v522 = vrot.slane %v521, 2
    %v523 = vadd.f32 %v521, %v522
    %v524 = vrot.slane %v523, 1
    %v525 = vadd.f32 %v523, %v524
    %v526 = vmul.f32 %v425, %v512
    %v527 = vmul.f32 %v426, %v512
    %v528 = vmul.f32 %v427, %v512
    %v529 = vmul.f32 %v428, %v512
    %v530 = vadd.f32 %v526, %v525
    %v531 = vadd.f32 %v527, %v525
    %v532 = vadd.f32 %v528, %v525
    %v533 = vadd.f32 %v529, %v525
    %v534 = vmax.f32 %v530, 0.0
    %v535 = vmax.f32 %v531, 0.0
    %v536 = vmax.f32 %v532, 0.0
    %v537 = vmax.f32 %v533, 0.0
    %vm538 = vcmask 516096
    %vm539 = vsmask.f32 256
    %vm540 = vmand %vm538, %vm539
    %v541 = vld [vmem:[#allocation2] sm:$0x1]
    %v542 = vsel %vm540, 0, %v541
    %543 = vst [vmem:[#allocation2] sm:$0x1] %v542
    %v544 = vld [vmem:[#allocation2 + $0xc] sm:$0x1]
    %v545 = vsel %vm540, 0, %v544
    %546 = vst [vmem:[#allocation2 + $0xc] sm:$0x1] %v545
    %vm547 = vsmask.f32 7938
    %vm548 = vmand %vm538, %vm547
    %v549 = vld [vmem:[#allocation2 + $0x8] sm:$0x1]
    %v550 = vsel %vm548, 0, %v549
    %551 = vst [vmem:[#allocation2 + $0x8] sm:$0x1] %v550
    %v552 = vld [vmem:[#allocation2 + $0x14] sm:$0x1]
    %v553 = vsel %vm548, 0, %v552
    %554 = vst [vmem:[#allocation2 + $0x14] sm:$0x1] %v553
    %v555 = vpack.c.bf16 %v535, %v534
    %v556 = vpack.c.bf16 %v537, %v536
    %v559 = vunpack.c.l.b16 %v555
    %v560 = vunpack.c.h.b16 %v555
    %v561 = vunpack.c.l.b16 %v556
    %v562 = vunpack.c.h.b16 %v556
    %v563 = vpack.c.b16 %v559, %v559
    %v564 = vpack.c.b16 %v560, %v560
    %v565 = vpack.c.b16 %v561, %v561
    %v566 = vpack.c.b16 %v562, %v562
    %vm567 = vsmask.f32 4368
    %vm568 = vmor %vm539, %vm567
    %v570 = vshrl.u32 %v563, 16
    %v572 = vrot.slane %v570, 7
    %v573 = vshll.u32 %v563, 16
    %v575 = vor.u32 %v572, %v573
    %v576 = vrot.slane %v572, 4
    %v578 = vshrl.u32 %v564, 16
    %v580 = vrot.slane %v578, 7
    %v581 = vshll.u32 %v564, 16
    %v583 = vor.u32 %v580, %v581
    %v584 = vsel %vm568, %v576, %v583
    %v585 = vrot.slane %v580, 4
    %v587 = vshrl.u32 %v565, 16
    %v589 = vrot.slane %v587, 7
    %v590 = vshll.u32 %v565, 16
    %v592 = vor.u32 %v589, %v590
    %v593 = vrot.slane %v589, 4
    %v595 = vshrl.u32 %v566, 16
    %v597 = vrot.slane %v595, 7
    %v598 = vshll.u32 %v566, 16
    %v600 = vor.u32 %v597, %v598
    %v601 = vsel %vm568, %v593, %v600
    %v602 = vrot.slane %v597, 4
    %vm609 = vcmask 519168
    %vm610 = vmand %vm609, %vm547
    %v611 = vld [vmem:[#allocation2] sm:$0xf]
    %v612 = vsel %vm610, %v575, %v611
    %613 = vst [vmem:[#allocation2] sm:$0xf] %v612
    %614 = vst.msk [vmem:[#allocation2 + $0x4] sm:$0xf] %vm481, %v584
    %v615 = vld [vmem:[#allocation2 + $0x8] sm:$0x1]
    %v616 = vsel %vm540, %v585, %v615
    %617 = vst [vmem:[#allocation2 + $0x8] sm:$0x1] %v616
    %v618 = vld [vmem:[#allocation2 + $0xc] sm:$0xf]
    %v619 = vsel %vm610, %v592, %v618
    %620 = vst [vmem:[#allocation2 + $0xc] sm:$0xf] %v619
    %621 = vst.msk [vmem:[#allocation2 + $0x10] sm:$0xf] %vm481, %v601
    %v622 = vld [vmem:[#allocation2 + $0x14] sm:$0x1]
    %v623 = vsel %vm540, %v602, %v622
    %624 = vst [vmem:[#allocation2 + $0x14] sm:$0x1] %v623
    %v625 = vld [vmem:[#allocation2] sm:$0xf]
    %v626 = vld [vmem:[#allocation2 + $0x4] sm:$0xf]
    %v627 = vld [vmem:[#allocation2 + $0xc] sm:$0xf]
    %v628 = vld [vmem:[#allocation2 + $0x10] sm:$0xf]
    %v629 = vld [vmem:[#allocation6] sm:$0xf]
    %v630 = vld [vmem:[#allocation6 + $0x4] sm:$0xf]
    %v631 = vld [vmem:[#allocation6 + $0x8] sm:$0xf]
    %v632 = vld [vmem:[#allocation6 + $0xc] sm:$0xf]
    %v633 = vld [vmem:[#allocation6 + $0x10] sm:$0xf]
    %v634 = vld [vmem:[#allocation6 + $0x14] sm:$0xf]
    %v635 = vld [vmem:[#allocation6 + $0x18] sm:$0xf]
    %v636 = vld [vmem:[#allocation6 + $0x1c] sm:$0xf]
    %v637 = vld [vmem:[#allocation2 + $0x8] sm:$0x1]
    %v638 = vld [vmem:[#allocation2 + $0x14] sm:$0x1]
    %v640 = vshrl.u32 %v625, 16
    %v642 = vrot.slane %v640, 4
    %v643 = vshll.u32 %v625, 16
    %v645 = vrot.slane %v643, 5
    %v646 = vor.u32 %v642, %v645
    %v647 = vrot.slane %v646, 4
    %v649 = vshll.u32 %v626, 16
    %v651 = vrot.slane %v649, 5
    %v652 = vsel %vm75, %v647, %v651
    %v653 = vshrl.u32 %v626, 16
    %v655 = vrot.slane %v653, 4
    %v656 = vor.u32 %v655, %v651
    %v657 = vrot.slane %v656, 4
    %v659 = vshll.u32 %v637, 16
    %v661 = vrot.slane %v659, 5
    %v662 = vsel %vm75, %v657, %v661
    %v664 = vshrl.u32 %v627, 16
    %v666 = vrot.slane %v664, 4
    %v667 = vshll.u32 %v627, 16
    %v669 = vrot.slane %v667, 5
    %v670 = vor.u32 %v666, %v669
    %v671 = vrot.slane %v670, 4
    %v673 = vshll.u32 %v628, 16
    %v675 = vrot.slane %v673, 5
    %v676 = vsel %vm75, %v671, %v675
    %v677 = vshrl.u32 %v628, 16
    %v679 = vrot.slane %v677, 4
    %v680 = vor.u32 %v679, %v675
    %v681 = vrot.slane %v680, 4
    %v683 = vshll.u32 %v638, 16
    %v685 = vrot.slane %v683, 5
    %v686 = vsel %vm75, %v681, %v685
    %s687 = scalar_lea.vmem [#allocation6], 32
    %v688 = vld [vmem:[%s687] sm:$0xf]
    %v689 = vld [vmem:[%s687 + $0x4] sm:$0xf]
    %v690 = vld [vmem:[%s687 + $0x8] sm:$0xf]
    %v691 = vld [vmem:[%s687 + $0xc] sm:$0xf]
    %v692 = vld [vmem:[%s687 + $0x10] sm:$0xf]
    %v693 = vld [vmem:[%s687 + $0x14] sm:$0xf]
    %v694 = vld [vmem:[%s687 + $0x18] sm:$0xf]
    %v695 = vld [vmem:[%s687 + $0x1c] sm:$0xf]
    %v696 = vunpack.c.l.b16 %v652
    %v697 = vunpack.c.l.b16 %v662
    %v698 = vunpack.c.l.b16 %v676
    %v699 = vunpack.c.l.b16 %v686
    %v700 = vpack.c.b16 %v697, %v696
    %v701 = vpack.c.b16 %v699, %v698
    %v710 = vunpack.c.l.b16 %v688
    %v711 = vunpack.c.l.b16 %v689
    %v712 = vunpack.c.l.b16 %v690
    %v713 = vunpack.c.l.b16 %v691
    %v714 = vunpack.c.l.b16 %v692
    %v715 = vunpack.c.l.b16 %v693
    %v716 = vunpack.c.l.b16 %v694
    %v717 = vunpack.c.l.b16 %v695
    %v718 = vpack.c.b16 %v711, %v710
    %v719 = vpack.c.b16 %v713, %v712
    %v720 = vpack.c.b16 %v715, %v714
    %v721 = vpack.c.b16 %v717, %v716
    %v727 = vsel %vm163, %v700, 0
    %v730 = vsel %vm163, %v701, 0
    %732 = vmatprep.subr.bf16.mxu0 0
    %733 = vmatpush1.bf16.msra.mxu0 %v718
    %734 = vmatprep.subr.bf16.mxu0 0
    %735 = vmatpush1.bf16.msra.mxu0 %v719
    %736 = vmatprep.subr.bf16.mxu0 0
    %737 = vmatpush1.bf16.msra.mxu0 %v720
    %738 = vmatprep.subr.bf16.mxu0 0
    %739 = vmatpush1.bf16.msra.mxu0 %v721
    %740 = vmatprep.subr.bf16.mxu0 0
    %741 = vmatpush1.bf16.msra.mxu0 0
    %742 = vmatprep.subr.bf16.mxu0 0
    %743 = vmatpush1.bf16.msra.mxu0 0
    %744 = vmatprep.subr.bf16.mxu0 0
    %745 = vmatpush1.bf16.msra.mxu0 0
    %746 = vmatprep.subr.bf16.mxu0 0
    %747 = vmatpush1.bf16.msra.mxu0 0
    %748 = vmatprep.subr.bf16.mxu0 0
    %749 = vmatpush1.bf16.msra.mxu0 0
    %750 = vmatprep.subr.bf16.mxu0 0
    %751 = vmatpush1.bf16.msra.mxu0 0
    %752 = vmatprep.subr.bf16.mxu0 0
    %753 = vmatpush1.bf16.msra.mxu0 0
    %754 = vmatprep.subr.bf16.mxu0 0
    %755 = vmatpush1.bf16.msra.mxu0 0
    %756 = vmatprep.subr.bf16.mxu0 0
    %757 = vmatpush1.bf16.msra.mxu0 0
    %758 = vmatprep.subr.bf16.mxu0 0
    %759 = vmatpush1.bf16.msra.mxu0 0
    %760 = vmatprep.subr.bf16.mxu0 0
    %761 = vmatpush1.bf16.msra.mxu0 0
    %762 = vmatprep.subr.bf16.mxu0 0
    %763 = vmatpush1.bf16.msra.mxu0 0
    %764 = vmatprep.mubr.bf16.mxu0 0
    %765 = vmatmul.mubr.bf16.gmra.mrb[0].mxu0 %v727
    %v766 = vpop.f32.mrb[0].mxu0
    %v767 = vadd.f32 0.0, %v766
    %v768 = vpop.f32.mrb[0].mxu0
    %v769 = vpop.f32.mrb[0].mxu0
    %v770 = vadd.f32 0.0, %v769
    %v771 = vpop.f32.mrb[0].mxu0
    %772 = vmatprep.mubr.bf16.mxu0 0
    %773 = vmatmul.mubr.bf16.gmra.mrb[0].mxu0 %v730
    %v774 = vpop.f32.mrb[0].mxu0
    %v775 = vadd.f32 0.0, %v774
    %v776 = vpop.f32.mrb[0].mxu0
    %v777 = vpop.f32.mrb[0].mxu0
    %v778 = vadd.f32 0.0, %v777
    %v779 = vpop.f32.mrb[0].mxu0
    %780 = vdwg.mxu0
    %v785 = vunpack.c.l.b16 %v625
    %v786 = vunpack.c.l.b16 %v626
    %v787 = vunpack.c.l.b16 %v627
    %v788 = vunpack.c.l.b16 %v628
    %v789 = vpack.c.b16 %v786, %v785
    %v790 = vpack.c.b16 %v788, %v787
    %v799 = vunpack.c.l.b16 %v629
    %v800 = vunpack.c.l.b16 %v630
    %v801 = vunpack.c.l.b16 %v631
    %v802 = vunpack.c.l.b16 %v632
    %v803 = vunpack.c.l.b16 %v633
    %v804 = vunpack.c.l.b16 %v634
    %v805 = vunpack.c.l.b16 %v635
    %v806 = vunpack.c.l.b16 %v636
    %v807 = vpack.c.b16 %v800, %v799
    %v808 = vpack.c.b16 %v802, %v801
    %v809 = vpack.c.b16 %v804, %v803
    %v810 = vpack.c.b16 %v806, %v805
    %v816 = vsel %vm163, %v789, 0
    %v819 = vsel %vm163, %v790, 0
    %821 = vmatprep.subr.bf16.mxu0 0
    %822 = vmatpush1.bf16.msra.mxu0 %v807
    %823 = vmatprep.subr.bf16.mxu0 0
    %824 = vmatpush1.bf16.msra.mxu0 %v808
    %825 = vmatprep.subr.bf16.mxu0 0
    %826 = vmatpush1.bf16.msra.mxu0 %v809
    %827 = vmatprep.subr.bf16.mxu0 0
    %828 = vmatpush1.bf16.msra.mxu0 %v810
    %829 = vmatprep.subr.bf16.mxu0 0
    %830 = vmatpush1.bf16.msra.mxu0 0
    %831 = vmatprep.subr.bf16.mxu0 0
    %832 = vmatpush1.bf16.msra.mxu0 0
    %833 = vmatprep.subr.bf16.mxu0 0
    %834 = vmatpush1.bf16.msra.mxu0 0
    %835 = vmatprep.subr.bf16.mxu0 0
    %836 = vmatpush1.bf16.msra.mxu0 0
    %837 = vmatprep.subr.bf16.mxu0 0
    %838 = vmatpush1.bf16.msra.mxu0 0
    %839 = vmatprep.subr.bf16.mxu0 0
    %840 = vmatpush1.bf16.msra.mxu0 0
    %841 = vmatprep.subr.bf16.mxu0 0
    %842 = vmatpush1.bf16.msra.mxu0 0
    %843 = vmatprep.subr.bf16.mxu0 0
    %844 = vmatpush1.bf16.msra.mxu0 0
    %845 = vmatprep.subr.bf16.mxu0 0
    %846 = vmatpush1.bf16.msra.mxu0 0
    %847 = vmatprep.subr.bf16.mxu0 0
    %848 = vmatpush1.bf16.msra.mxu0 0
    %849 = vmatprep.subr.bf16.mxu0 0
    %850 = vmatpush1.bf16.msra.mxu0 0
    %851 = vmatprep.subr.bf16.mxu0 0
    %852 = vmatpush1.bf16.msra.mxu0 0
    %853 = vmatprep.mubr.bf16.mxu0 0
    %854 = vmatmul.mubr.bf16.gmra.mrb[0].mxu0 %v816
    %v855 = vpop.f32.mrb[0].mxu0
    %v856 = vadd.f32 %v767, %v855
    %v857 = vpop.f32.mrb[0].mxu0
    %v858 = vpop.f32.mrb[0].mxu0
    %v859 = vadd.f32 %v770, %v858
    %v860 = vpop.f32.mrb[0].mxu0
    %861 = vmatprep.mubr.bf16.mxu0 0
    %862 = vmatmul.mubr.bf16.gmra.mrb[0].mxu0 %v819
    %v863 = vpop.f32.mrb[0].mxu0
    %v864 = vadd.f32 %v775, %v863
    %v865 = vpop.f32.mrb[0].mxu0
    %v866 = vpop.f32.mrb[0].mxu0
    %v867 = vadd.f32 %v778, %v866
    %v868 = vpop.f32.mrb[0].mxu0
    %869 = vdwg.mxu0
    %v870 = vld [vmem:[#allocation2] sm:$0xe]
    %v871 = vld [vmem:[#allocation2 + $0xc] sm:$0xe]
    %v876 = vrot.slane %v870, 5
    %v877 = vrot.slane %v876, 4
    %v878 = vrot.slane %v626, 5
    %v879 = vsel %vm316, %v877, %v878
    %v880 = vrot.slane %v878, 4
    %v881 = vrot.slane %v637, 5
    %v882 = vsel %vm316, %v880, %v881
    %v883 = vrot.slane %v871, 5
    %v884 = vrot.slane %v883, 4
    %v885 = vrot.slane %v628, 5
    %v886 = vsel %vm316, %v884, %v885
    %v887 = vrot.slane %v885, 4
    %v888 = vrot.slane %v638, 5
    %v889 = vsel %vm316, %v887, %v888
    %s890 = scalar_lea.vmem [#allocation6], 64
    %v891 = vld [vmem:[%s890] sm:$0xf]
    %v892 = vld [vmem:[%s890 + $0x4] sm:$0xf]
    %v893 = vld [vmem:[%s890 + $0x8] sm:$0xf]
    %v894 = vld [vmem:[%s890 + $0xc] sm:$0xf]
    %v895 = vld [vmem:[%s890 + $0x10] sm:$0xf]
    %v896 = vld [vmem:[%s890 + $0x14] sm:$0xf]
    %v897 = vld [vmem:[%s890 + $0x18] sm:$0xf]
    %v898 = vld [vmem:[%s890 + $0x1c] sm:$0xf]
    %v899 = vunpack.c.l.b16 %v879
    %v900 = vunpack.c.l.b16 %v882
    %v901 = vunpack.c.l.b16 %v886
    %v902 = vunpack.c.l.b16 %v889
    %v903 = vpack.c.b16 %v900, %v899
    %v904 = vpack.c.b16 %v902, %v901
    %v913 = vunpack.c.l.b16 %v891
    %v914 = vunpack.c.l.b16 %v892
    %v915 = vunpack.c.l.b16 %v893
    %v916 = vunpack.c.l.b16 %v894
    %v917 = vunpack.c.l.b16 %v895
    %v918 = vunpack.c.l.b16 %v896
    %v919 = vunpack.c.l.b16 %v897
    %v920 = vunpack.c.l.b16 %v898
    %v921 = vpack.c.b16 %v914, %v913
    %v922 = vpack.c.b16 %v916, %v915
    %v923 = vpack.c.b16 %v918, %v917
    %v924 = vpack.c.b16 %v920, %v919
    %v930 = vsel %vm163, %v903, 0
    %v933 = vsel %vm163, %v904, 0
    %935 = vmatprep.subr.bf16.mxu0 0
    %936 = vmatpush1.bf16.msra.mxu0 %v921
    %937 = vmatprep.subr.bf16.mxu0 0
    %938 = vmatpush1.bf16.msra.mxu0 %v922
    %939 = vmatprep.subr.bf16.mxu0 0
    %940 = vmatpush1.bf16.msra.mxu0 %v923
    %941 = vmatprep.subr.bf16.mxu0 0
    %942 = vmatpush1.bf16.msra.mxu0 %v924
    %943 = vmatprep.subr.bf16.mxu0 0
    %944 = vmatpush1.bf16.msra.mxu0 0
    %945 = vmatprep.subr.bf16.mxu0 0
    %946 = vmatpush1.bf16.msra.mxu0 0
    %947 = vmatprep.subr.bf16.mxu0 0
    %948 = vmatpush1.bf16.msra.mxu0 0
    %949 = vmatprep.subr.bf16.mxu0 0
    %950 = vmatpush1.bf16.msra.mxu0 0
    %951 = vmatprep.subr.bf16.mxu0 0
    %952 = vmatpush1.bf16.msra.mxu0 0
    %953 = vmatprep.subr.bf16.mxu0 0
    %954 = vmatpush1.bf16.msra.mxu0 0
    %955 = vmatprep.subr.bf16.mxu0 0
    %956 = vmatpush1.bf16.msra.mxu0 0
    %957 = vmatprep.subr.bf16.mxu0 0
    %958 = vmatpush1.bf16.msra.mxu0 0
    %959 = vmatprep.subr.bf16.mxu0 0
    %960 = vmatpush1.bf16.msra.mxu0 0
    %961 = vmatprep.subr.bf16.mxu0 0
    %962 = vmatpush1.bf16.msra.mxu0 0
    %963 = vmatprep.subr.bf16.mxu0 0
    %964 = vmatpush1.bf16.msra.mxu0 0
    %965 = vmatprep.subr.bf16.mxu0 0
    %966 = vmatpush1.bf16.msra.mxu0 0
    %967 = vmatprep.mubr.bf16.mxu0 0
    %968 = vmatmul.mubr.bf16.gmra.mrb[0].mxu0 %v930
    %v969 = vpop.f32.mrb[0].mxu0
    %v970 = vadd.f32 0.0, %v969
    %v971 = vpop.f32.mrb[0].mxu0
    %v972 = vpop.f32.mrb[0].mxu0
    %v973 = vadd.f32 0.0, %v972
    %v974 = vpop.f32.mrb[0].mxu0
    %975 = vmatprep.mubr.bf16.mxu0 0
    %976 = vmatmul.mubr.bf16.gmra.mrb[0].mxu0 %v933
    %v977 = vpop.f32.mrb[0].mxu0
    %v978 = vadd.f32 0.0, %v977
    %v979 = vpop.f32.mrb[0].mxu0
    %v980 = vpop.f32.mrb[0].mxu0
    %v981 = vadd.f32 0.0, %v980
    %v982 = vpop.f32.mrb[0].mxu0
    %983 = vdwg.mxu0
    %v984 = vadd.f32 %v856, %v970
    %v985 = vadd.f32 %v859, %v973
    %v986 = vadd.f32 %v864, %v978
    %v987 = vadd.f32 %v867, %v981
    %v988 = vld [vmem:[%s5] sm:$0xff]
    %v989 = vld [vmem:[%s6] sm:$0xff]
    %vm990 = vcmp.lt.s32.totalorder %v432, 0
    %v991 = vsub.s32 0, %v432
    %v992 = vsel %vm990, %v991, %v432
    %v993 = vshrl.u32 %v992, 3
    %v994 = vand.u32 %v992, 7
    %v995 = vsub.s32 0, %v994
    %v996 = vsel %vm990, %v995, %v994
    %vm997 = vcmp.ne.s32.totalorder %v996, 0
    %vm998 = vcmp.lt.s32.totalorder %v996, 0
    %vm999 = vmand %vm998, %vm997
    %v1000 = vadd.s32 %v996, 8
    %v1001 = vsel %vm999, %v1000, %v996
    %vm1002 = vcmp.eq.s32.totalorder %v1001, %v446
    %v1003 = vsel %vm1002, 1, 0
    %v1004 = vcvt.s32.f32 %v1003
    %v1005 = vadd.f32 %v984, %v985
    %v1006 = vadd.f32 %v1005, %v986
    %v1007 = vadd.f32 %v1006, %v987
    %v1008 = vrot.slane %v1007, 4
    %v1009 = vadd.f32 %v1007, %v1008
    %v1010 = vrot.slane %v1009, 2
    %v1011 = vadd.f32 %v1009, %v1010
    %v1012 = vrot.slane %v1011, 1
    %v1013 = vadd.f32 %v1011, %v1012
    %v1014 = vmul.f32 %v984, %v984
    %v1015 = vmul.f32 %v985, %v985
    %v1016 = vmul.f32 %v986, %v986
    %v1017 = vmul.f32 %v987, %v987
    %v1018 = vadd.f32 %v1014, %v1015
    %v1019 = vadd.f32 %v1018, %v1016
    %v1020 = vadd.f32 %v1019, %v1017
    %v1021 = vrot.slane %v1020, 4
    %v1022 = vadd.f32 %v1020, %v1021
    %v1023 = vrot.slane %v1022, 2
    %v1024 = vadd.f32 %v1022, %v1023
    %v1025 = vrot.slane %v1024, 1
    %v1026 = vadd.f32 %v1024, %v1025
    %v1027 = vmul.f32 %v1004, %v1013
    %1028 = vadd.xlane.f32.xlu0 %v1027
    %v1029 = vpop.xlane.xlu0 %1028
    %v1030 = vmul.f32 %v1004, %v1026
    %1031 = vadd.xlane.f32.xlu0 %v1030
    %v1032 = vpop.xlane.xlu0 %1031
    %v1033 = vmul.f32 %v1029, %v489
    %v1034 = vmul.f32 %v1032, %v489
    %v1035 = vmul.f32 %v1033, %v1033
    %v1036 = vsub.f32 %v1034, %v1035
    %v1037 = vmax.f32 %v1036, 0.0
    %v1038 = vadd.f32 %v1037, 1e-05
    %v1039 = vrsqrt.pop %v1038
    %v1040 = vmul.f32 %v988, %v1039
    %v1041 = vmul.f32 %v1033, %v1040
    %v1042 = vsub.f32 %v989, %v1041
    %1044 = vset.pattern.permute.xlu0 0
    %1045 = vperm.xlu0 %1044, %v1040
    %v1046 = vpop.permute.xlu0 %1045
    %v1048 = vmul.f32 %v1004, %v1046
    %v1049 = vrot.slane %v1048, 4
    %v1050 = vadd.f32 %v1048, %v1049
    %v1051 = vrot.slane %v1050, 2
    %v1052 = vadd.f32 %v1050, %v1051
    %v1053 = vrot.slane %v1052, 1
    %v1054 = vadd.f32 %v1052, %v1053
    %1056 = vset.pattern.permute.xlu0 0
    %1057 = vperm.xlu0 %1056, %v1042
    %v1058 = vpop.permute.xlu0 %1057
    %v1060 = vmul.f32 %v1004, %v1058
    %v1061 = vrot.slane %v1060, 4
    %v1062 = vadd.f32 %v1060, %v1061
    %v1063 = vrot.slane %v1062, 2
    %v1064 = vadd.f32 %v1062, %v1063
    %v1065 = vrot.slane %v1064, 1
    %v1066 = vadd.f32 %v1064, %v1065
    %v1067 = vmul.f32 %v984, %v1054
    %v1068 = vmul.f32 %v985, %v1054
    %v1069 = vmul.f32 %v986, %v1054
    %v1070 = vmul.f32 %v987, %v1054
    %v1071 = vadd.f32 %v1067, %v1066
    %v1072 = vadd.f32 %v1068, %v1066
    %v1073 = vadd.f32 %v1069, %v1066
    %v1074 = vadd.f32 %v1070, %v1066
    %v1075 = vld [vmem:[%s0] sm:$0xf]
    %v1076 = vld [vmem:[%s0 + $0x4] sm:$0xf]
    %v1077 = vld [vmem:[%s0 + $0x8] sm:$0x1]
    %v1078 = vld [vmem:[%s0 + $0xc] sm:$0xf]
    %v1079 = vld [vmem:[%s0 + $0x10] sm:$0xf]
    %v1080 = vld [vmem:[%s0 + $0x14] sm:$0x1]
    %v1082 = vshrl.u32 %v1075, 16
    %v1084 = vrot.slane %v1082, 4
    %v1085 = vshll.u32 %v1075, 16
    %v1087 = vrot.slane %v1085, 5
    %v1088 = vor.u32 %v1084, %v1087
    %v1089 = vrot.slane %v1088, 4
    %v1091 = vshll.u32 %v1076, 16
    %v1093 = vrot.slane %v1091, 5
    %v1094 = vsel %vm75, %v1089, %v1093
    %v1095 = vshrl.u32 %v1076, 16
    %v1097 = vrot.slane %v1095, 4
    %v1098 = vor.u32 %v1097, %v1093
    %v1099 = vrot.slane %v1098, 4
    %v1101 = vshll.u32 %v1077, 16
    %v1103 = vrot.slane %v1101, 5
    %v1104 = vsel %vm75, %v1099, %v1103
    %v1106 = vshrl.u32 %v1078, 16
    %v1108 = vrot.slane %v1106, 4
    %v1109 = vshll.u32 %v1078, 16
    %v1111 = vrot.slane %v1109, 5
    %v1112 = vor.u32 %v1108, %v1111
    %v1113 = vrot.slane %v1112, 4
    %v1115 = vshll.u32 %v1079, 16
    %v1117 = vrot.slane %v1115, 5
    %v1118 = vsel %vm75, %v1113, %v1117
    %v1119 = vshrl.u32 %v1079, 16
    %v1121 = vrot.slane %v1119, 4
    %v1122 = vor.u32 %v1121, %v1117
    %v1123 = vrot.slane %v1122, 4
    %v1125 = vshll.u32 %v1080, 16
    %v1127 = vrot.slane %v1125, 5
    %v1128 = vsel %vm75, %v1123, %v1127
    %v1129 = vld [vmem:[%s7] sm:$0xf]
    %v1130 = vld [vmem:[%s7 + $0x4] sm:$0xf]
    %v1131 = vld [vmem:[%s7 + $0x8] sm:$0xf]
    %v1132 = vld [vmem:[%s7 + $0xc] sm:$0xf]
    %v1133 = vld [vmem:[%s7 + $0x10] sm:$0xf]
    %v1134 = vld [vmem:[%s7 + $0x14] sm:$0xf]
    %v1135 = vld [vmem:[%s7 + $0x18] sm:$0xf]
    %v1136 = vld [vmem:[%s7 + $0x1c] sm:$0xf]
    %v1137 = vunpack.c.l.b16 %v1094
    %v1138 = vunpack.c.l.b16 %v1104
    %v1139 = vunpack.c.l.b16 %v1118
    %v1140 = vunpack.c.l.b16 %v1128
    %v1141 = vpack.c.b16 %v1138, %v1137
    %v1142 = vpack.c.b16 %v1140, %v1139
    %v1151 = vunpack.c.l.b16 %v1129
    %v1152 = vunpack.c.l.b16 %v1130
    %v1153 = vunpack.c.l.b16 %v1131
    %v1154 = vunpack.c.l.b16 %v1132
    %v1155 = vunpack.c.l.b16 %v1133
    %v1156 = vunpack.c.l.b16 %v1134
    %v1157 = vunpack.c.l.b16 %v1135
    %v1158 = vunpack.c.l.b16 %v1136
    %v1159 = vpack.c.b16 %v1152, %v1151
    %v1160 = vpack.c.b16 %v1154, %v1153
    %v1161 = vpack.c.b16 %v1156, %v1155
    %v1162 = vpack.c.b16 %v1158, %v1157
    %v1168 = vsel %vm163, %v1141, 0
    %v1171 = vsel %vm163, %v1142, 0
    %1173 = vmatprep.subr.bf16.mxu0 0
    %1174 = vmatpush1.bf16.msra.mxu0 %v1159
    %1175 = vmatprep.subr.bf16.mxu0 0
    %1176 = vmatpush1.bf16.msra.mxu0 %v1160
    %1177 = vmatprep.subr.bf16.mxu0 0
    %1178 = vmatpush1.bf16.msra.mxu0 %v1161
    %1179 = vmatprep.subr.bf16.mxu0 0
    %1180 = vmatpush1.bf16.msra.mxu0 %v1162
    %1181 = vmatprep.subr.bf16.mxu0 0
    %1182 = vmatpush1.bf16.msra.mxu0 0
    %1183 = vmatprep.subr.bf16.mxu0 0
    %1184 = vmatpush1.bf16.msra.mxu0 0
    %1185 = vmatprep.subr.bf16.mxu0 0
    %1186 = vmatpush1.bf16.msra.mxu0 0
    %1187 = vmatprep.subr.bf16.mxu0 0
    %1188 = vmatpush1.bf16.msra.mxu0 0
    %1189 = vmatprep.subr.bf16.mxu0 0
    %1190 = vmatpush1.bf16.msra.mxu0 0
    %1191 = vmatprep.subr.bf16.mxu0 0
    %1192 = vmatpush1.bf16.msra.mxu0 0
    %1193 = vmatprep.subr.bf16.mxu0 0
    %1194 = vmatpush1.bf16.msra.mxu0 0
    %1195 = vmatprep.subr.bf16.mxu0 0
    %1196 = vmatpush1.bf16.msra.mxu0 0
    %1197 = vmatprep.subr.bf16.mxu0 0
    %1198 = vmatpush1.bf16.msra.mxu0 0
    %1199 = vmatprep.subr.bf16.mxu0 0
    %1200 = vmatpush1.bf16.msra.mxu0 0
    %1201 = vmatprep.subr.bf16.mxu0 0
    %1202 = vmatpush1.bf16.msra.mxu0 0
    %1203 = vmatprep.subr.bf16.mxu0 0
    %1204 = vmatpush1.bf16.msra.mxu0 0
    %1205 = vmatprep.mubr.bf16.mxu0 0
    %1206 = vmatmul.mubr.bf16.gmra.mrb[0].mxu0 %v1168
    %v1207 = vpop.f32.mrb[0].mxu0
    %v1208 = vadd.f32 0.0, %v1207
    %v1209 = vpop.f32.mrb[0].mxu0
    %v1210 = vpop.f32.mrb[0].mxu0
    %v1211 = vadd.f32 0.0, %v1210
    %v1212 = vpop.f32.mrb[0].mxu0
    %1213 = vmatprep.mubr.bf16.mxu0 0
    %1214 = vmatmul.mubr.bf16.gmra.mrb[0].mxu0 %v1171
    %v1215 = vpop.f32.mrb[0].mxu0
    %v1216 = vadd.f32 0.0, %v1215
    %v1217 = vpop.f32.mrb[0].mxu0
    %v1218 = vpop.f32.mrb[0].mxu0
    %v1219 = vadd.f32 0.0, %v1218
    %v1220 = vpop.f32.mrb[0].mxu0
    %1221 = vdwg.mxu0
    %v1222 = vadd.f32 %v1071, %v1208
    %v1223 = vadd.f32 %v1072, %v1211
    %v1224 = vadd.f32 %v1073, %v1216
    %v1225 = vadd.f32 %v1074, %v1219
    %v1226 = vmax.f32 %v1222, 0.0
    %v1227 = vmax.f32 %v1223, 0.0
    %v1228 = vmax.f32 %v1224, 0.0
    %v1229 = vmax.f32 %v1225, 0.0
    %1230 = vst [vmem:[#allocation8] sm:$0xff] %v1226
    %1231 = vst [vmem:[#allocation8 + $0x8] sm:$0xff] %v1227
    %1232 = vst [vmem:[#allocation8 + $0x10] sm:$0xff] %v1228
    %1233 = vst [vmem:[#allocation8 + $0x18] sm:$0xff] %v1229
    // Predicated region
    $region42: #{tpu_custom_call.1} parent=1 // pred_check
      _
    $region43: #{tpu_custom_call.1} parent=1 // pred_check_branch
      %1235 = sbr.rel (0) target = $region45
    $region44: #{tpu_custom_call.1} parent=1 // pred_region
      %s1237 = ssub.s32 512, 512
      %1238 = vsyncadd [#allocation5], %s1237
      %s1239 = sshll.u32 [#allocation8], 4
      %s1240 = int_to_ptr.vmem [resolvable:$true] %s1239
      %1245 = dma.vmem_to_hbm [thread:$0]  %s1240, 512, %s8, [#allocation5], 128, 128, 8
    $region45: #{tpu_custom_call.1} parent=1 // pred_fallthru
      _
    // Predicated region
    $region46: #{tpu_custom_call.1} parent=1 // pred_check
      _
    $region47: #{tpu_custom_call.1} parent=1 // pred_check_branch
      %1247 = sbr.rel (0) target = $region49
    $region48: #{tpu_custom_call.1} parent=1 // pred_region
      %1248 = dma.done [#allocation5], 512
    $region49: #{tpu_custom_call.1} parent=1 // pred_fallthru
      _
    %1249 = vsyncpa [#allocation4], 1
    %1250 = vsyncpa [#allocation7], 1
    %1251 = vsyncpa [#allocation5], 1

</llo_original>
